<compile_context>
chip_gen: v7x
topology: tpu7x:2x2x1
jax: 0.10.0
libtpu: 0.0.40
codegen_flags: <defaults>
</compile_context>

<pallas_src>
import jax
import jax.numpy as jnp
from jax.experimental import pallas as pl
from jax.experimental.pallas import tpu as pltpu

ATTN_THRESHOLD = 0.1


def roberta_gcn_kernel(x_ref, xt_ref, mask_ref, w1_ref, b1_ref, w2_ref, b2_ref,
                       pooled_ref):
    x = x_ref[0]                              # [S, E] bf16
    xt = xt_ref[0]                            # [E, S] bf16 (pre-transposed outside)
    mask_col = mask_ref[0, 0][:, None]        # [S, 1] f32 (1.0 = valid token)
    S = x.shape[0]

    # attention = softmax(X X^T, dim=-1): bf16 MXU operands, f32 accumulate,
    # f32 softmax math so the 0.1 thresholding stays stable.
    scores = jnp.dot(x, xt, preferred_element_type=jnp.float32)          # [S, S]
    scores = scores - jnp.max(scores, axis=-1, keepdims=True)
    e = jnp.exp(scores)
    att = e * pl.reciprocal(jnp.sum(e, axis=-1, keepdims=True), approx=True)

    # Dense weighted adjacency with PyG add_remaining_self_loops semantics:
    # keep thresholded edges with their attention weight; a node whose
    # thresholded self-edge is missing gets a self-loop of weight 1.0.
    keep = att > ATTN_THRESHOLD
    rows = jax.lax.broadcasted_iota(jnp.int32, (S, S), 0)
    cols = jax.lax.broadcasted_iota(jnp.int32, (S, S), 1)
    adj = jnp.where(keep, att, jnp.where(rows == cols, 1.0, 0.0))        # [S, S] f32

    # Symmetric GCN normalization: degree over targets (columns),
    # norm_ij = d_i^-1/2 * adj_ij * d_j^-1/2.
    deg = jnp.sum(adj, axis=0)                                           # [S]
    dis_col = jnp.where(deg > 0.0, jax.lax.rsqrt(deg), 0.0)[:, None]     # [S, 1]
    adj_b = adj.astype(jnp.bfloat16)

    def gcn_aggregate(msg):
        # out[j] = dis[j] * sum_i adj[i, j] * dis[i] * msg[i]
        #        = (D^-1/2 A^T D^-1/2) @ msg, with the contraction over adj's
        # axis 0 done inside the MXU (no materialized A_hat, no XLU transpose).
        dm = (dis_col * msg).astype(jnp.bfloat16)
        agg = jax.lax.dot_general(
            adj_b, dm,
            dimension_numbers=(((0,), (0,)), ((), ())),
            preferred_element_type=jnp.float32)
        return dis_col * agg

    # GCN layer 1: A_hat @ (X W1) + b1, then ReLU.
    m1 = jnp.dot(x, w1_ref[...], preferred_element_type=jnp.float32)     # [S, H1]
    h1 = jnp.maximum(gcn_aggregate(m1) + b1_ref[...], 0.0)
    # TODO(synk): F.dropout(p=0.2) is a no-op in eval mode (identity); bn1 is
    # nn.Identity because PARAMS['batch_norm'] is False.

    # GCN layer 2: A_hat @ (h1 W2) + b2.
    m2 = jnp.dot(h1.astype(jnp.bfloat16), w2_ref[...],
                 preferred_element_type=jnp.float32)                     # [S, H2]
    h2 = gcn_aggregate(m2) + b2_ref[...]

    # Masked mean pooling over valid tokens -> graph embedding [1, H2].
    msum = jnp.sum(mask_col, axis=0, keepdims=True)                      # [1, 1]
    inv_n = pl.reciprocal(jnp.maximum(msum, 1.0), approx=True)
    pooled_ref[0] = jnp.sum(h2 * mask_col, axis=0, keepdims=True) * inv_n


def roberta_gcn_forward(hidden_states, attention_mask, params):
    """hidden_states: [B, S, E] f32; attention_mask: [B, S] (0/1). Returns [B, C]."""
    w1, b1, w2, b2, wc, bc = params
    B, S, E = hidden_states.shape
    H1 = w1.shape[1]
    H2 = w2.shape[1]

    x_bf = hidden_states.astype(jnp.bfloat16)
    xt_bf = jnp.swapaxes(x_bf, 1, 2)                  # [B, E, S], transposed once in XLA
    mask3 = attention_mask.astype(jnp.float32).reshape(B, 1, S)

    pooled = pl.pallas_call(
        roberta_gcn_kernel,
        out_shape=jax.ShapeDtypeStruct((B, 1, H2), jnp.float32),
        grid_spec=pltpu.PrefetchScalarGridSpec(
            num_scalar_prefetch=0,
            grid=(B,),
            in_specs=[
                pl.BlockSpec((1, S, E), lambda b: (b, 0, 0)),   # X slice (bf16)
                pl.BlockSpec((1, E, S), lambda b: (b, 0, 0)),   # X^T slice (bf16)
                pl.BlockSpec((1, 1, S), lambda b: (b, 0, 0)),   # attention mask
                pl.BlockSpec((E, H1), lambda b: (0, 0)),        # gcn1 weight (bf16)
                pl.BlockSpec((1, H1), lambda b: (0, 0)),        # gcn1 bias
                pl.BlockSpec((H1, H2), lambda b: (0, 0)),       # gcn2 weight (bf16)
                pl.BlockSpec((1, H2), lambda b: (0, 0)),        # gcn2 bias
            ],
            out_specs=pl.BlockSpec((1, 1, H2), lambda b: (b, 0, 0)),
        ),
        compiler_params=pltpu.CompilerParams(
            dimension_semantics=("parallel",),        # batch axis feeds both TCs on v7x
            vmem_limit_bytes=48 * 1024 * 1024,        # headroom, under v7x 64 MiB phys
        ),
    )(x_bf, xt_bf, mask3,
      w1.astype(jnp.bfloat16), b1, w2.astype(jnp.bfloat16), b2)

    # Classifier + sigmoid on the stacked graph embeddings (outside the
    # per-sample loop in the reference module as well); keeps the kernel
    # output lane-dense instead of a C=1 masked store.
    logits = pooled.reshape(B, H2) @ wc + bc
    return jax.nn.sigmoid(logits)


def init_params(key, embed_dim, hidden_dims, num_classes):
    k1, k2, k3, k4, k5, k6 = jax.random.split(key, 6)
    w1 = 0.1 * jax.random.normal(k1, (embed_dim, hidden_dims[0]), jnp.float32)
    b1 = 0.1 * jax.random.normal(k2, (1, hidden_dims[0]), jnp.float32)
    w2 = 0.1 * jax.random.normal(k3, (hidden_dims[0], hidden_dims[1]), jnp.float32)
    b2 = 0.1 * jax.random.normal(k4, (1, hidden_dims[1]), jnp.float32)
    wc = 0.1 * jax.random.normal(k5, (hidden_dims[1], num_classes), jnp.float32)
    bc = 0.1 * jax.random.normal(k6, (1, num_classes), jnp.float32)
    return (w1, b1, w2, b2, wc, bc)


if __name__ == "__main__":
    # Scaled-down but tile-aligned shapes consistent with the forward pass:
    # batch=2, seq=128, embed=256, hidden_dims=[256, 128], num_classes=1.
    B, S, E = 2, 128, 256
    H = [256, 128]
    C = 1

    key = jax.random.PRNGKey(0)
    k_x, k_p = jax.random.split(key)

    # TODO(synk): pretrained frozen RoBERTa encoder is not reproducible in-script;
    # its output (last_hidden_state) is synthesized deterministically instead.
    hidden_states = jax.random.normal(k_x, (B, S, E), jnp.float32)
    attention_mask = jnp.concatenate(
        [jnp.ones((1, S), jnp.int32),
         jnp.concatenate([jnp.ones((1, S // 2), jnp.int32),
                          jnp.zeros((1, S - S // 2), jnp.int32)], axis=1)],
        axis=0)

    params = init_params(k_p, E, H, C)

    fwd = jax.jit(roberta_gcn_forward)
    probs = fwd(hidden_states, attention_mask, params)
    probs = jax.block_until_ready(probs)

    assert probs.shape == (B, C)
    assert bool(jnp.all(jnp.isfinite(probs)))
    assert bool(jnp.all((probs >= 0.0) & (probs <= 1.0)))
    print("KERNEL_OK")
</pallas_src>

<mosaic_0001>
module attributes {stable_mosaic.version = 11 : i64} {
  func.func @roberta_gcn_kernel(%arg0: i32, %arg1: memref<1x128x256xbf16, #tpu.memory_space<vmem>>, %arg2: memref<1x256x128xbf16, #tpu.memory_space<vmem>>, %arg3: memref<1x1x128xf32, #tpu.memory_space<vmem>>, %arg4: memref<256x256xbf16, #tpu.memory_space<vmem>>, %arg5: memref<1x256xf32, #tpu.memory_space<vmem>>, %arg6: memref<256x128xbf16, #tpu.memory_space<vmem>>, %arg7: memref<1x128xf32, #tpu.memory_space<vmem>>, %arg8: memref<1x1x128xf32, #tpu.memory_space<vmem>>) attributes {dimension_semantics = [#tpu.dimension_semantics<parallel>], iteration_bounds = array<i64: 2>, scalar_prefetch = 0 : i64, scratch_operands = 0 : i64, tpu.core_type = #tpu.core_type<tc>, window_params = [{transform_indices = @transform_0, window_bounds = array<i64: 1, 128, 256>}, {transform_indices = @transform_1, window_bounds = array<i64: 1, 256, 128>}, {transform_indices = @transform_2, window_bounds = array<i64: 1, 1, 128>}, {pipeline_mode = #tpu.pipeline_mode<synchronous>, transform_indices = @transform_3, window_bounds = array<i64: 256, 256>}, {pipeline_mode = #tpu.pipeline_mode<synchronous>, transform_indices = @transform_4, window_bounds = array<i64: 1, 256>}, {pipeline_mode = #tpu.pipeline_mode<synchronous>, transform_indices = @transform_5, window_bounds = array<i64: 256, 128>}, {pipeline_mode = #tpu.pipeline_mode<synchronous>, transform_indices = @transform_6, window_bounds = array<i64: 1, 128>}, {transform_indices = @transform_7, window_bounds = array<i64: 1, 1, 128>}]} {
    %c0 = arith.constant 0 : index
    %c0_0 = arith.constant 0 : index
    %c0_1 = arith.constant 0 : index
    %0 = vector.load %arg1[%c0, %c0_0, %c0_1] : memref<1x128x256xbf16, #tpu.memory_space<vmem>>, vector<1x128x256xbf16>
    %1 = vector.shape_cast %0 : vector<1x128x256xbf16> to vector<128x256xbf16>
    %c0_2 = arith.constant 0 : index
    %c0_3 = arith.constant 0 : index
    %c0_4 = arith.constant 0 : index
    %2 = vector.load %arg2[%c0_2, %c0_3, %c0_4] : memref<1x256x128xbf16, #tpu.memory_space<vmem>>, vector<1x256x128xbf16>
    %3 = vector.shape_cast %2 : vector<1x256x128xbf16> to vector<256x128xbf16>
    %c0_5 = arith.constant 0 : index
    %c0_6 = arith.constant 0 : index
    %c0_7 = arith.constant 0 : index
    %4 = vector.load %arg3[%c0_5, %c0_6, %c0_7] : memref<1x1x128xf32, #tpu.memory_space<vmem>>, vector<1x1x128xf32>
    %5 = vector.shape_cast %4 : vector<1x1x128xf32> to vector<128xf32>
    %6 = vector.shape_cast %5 : vector<128xf32> to vector<128x1xf32>
    %cst = arith.constant dense<0.000000e+00> : vector<128x128xf32>
    %7 = tpu.matmul %1, %3, %cst {dimension_numbers = #tpu.dot_dimension_numbers<[1], [0], [0], [1], [0, 0, 1, 1], [], []>} : vector<128x256xbf16>, vector<256x128xbf16>, vector<128x128xf32> -> vector<128x128xf32>
    %cst_8 = arith.constant dense<0xFF800000> : vector<128xf32>
    %8 = vector.multi_reduction <maximumf>, %7, %cst_8 [1] : vector<128x128xf32> to vector<128xf32>
    %9 = vector.shape_cast %8 : vector<128xf32> to vector<128x1xf32>
    %10 = vector.broadcast %9 : vector<128x1xf32> to vector<128x128xf32>
    %11 = arith.subf %7, %10 : vector<128x128xf32>
    %12 = math.exp %11 : vector<128x128xf32>
    %cst_9 = arith.constant dense<0.000000e+00> : vector<128xf32>
    %13 = vector.multi_reduction <add>, %12, %cst_9 [1] : vector<128x128xf32> to vector<128xf32>
    %14 = vector.shape_cast %13 : vector<128xf32> to vector<128x1xf32>
    %15 = tpu.reciprocal %14 {approx = true} : vector<128x1xf32> -> vector<128x1xf32>
    %16 = vector.broadcast %15 : vector<128x1xf32> to vector<128x128xf32>
    %17 = arith.mulf %12, %16 : vector<128x128xf32>
    %cst_10 = arith.constant 1.000000e-01 : f32
    %18 = vector.broadcast %cst_10 : f32 to vector<128x128xf32>
    %19 = arith.cmpf ogt, %17, %18 : vector<128x128xf32>
    %20 = tpu.iota {dimensions = array<i32: 0>} : vector<128x128xi32>
    %21 = tpu.iota {dimensions = array<i32: 1>} : vector<128x128xi32>
    %22 = arith.cmpi eq, %20, %21 : vector<128x128xi32>
    %cst_11 = arith.constant 1.000000e+00 : f32
    %cst_12 = arith.constant 0.000000e+00 : f32
    %23 = vector.broadcast %cst_11 : f32 to vector<128x128xf32>
    %24 = vector.broadcast %cst_12 : f32 to vector<128x128xf32>
    %25 = arith.select %22, %23, %24 : vector<128x128xi1>, vector<128x128xf32>
    %26 = arith.select %19, %17, %25 : vector<128x128xi1>, vector<128x128xf32>
    %cst_13 = arith.constant dense<0.000000e+00> : vector<128xf32>
    %27 = vector.multi_reduction <add>, %26, %cst_13 [0] : vector<128x128xf32> to vector<128xf32>
    %cst_14 = arith.constant 0.000000e+00 : f32
    %28 = vector.broadcast %cst_14 : f32 to vector<128xf32>
    %29 = arith.cmpf ogt, %27, %28 : vector<128xf32>
    %30 = math.rsqrt %27 : vector<128xf32>
    %cst_15 = arith.constant 0.000000e+00 : f32
    %31 = vector.broadcast %cst_15 : f32 to vector<128xf32>
    %32 = arith.select %29, %30, %31 : vector<128xi1>, vector<128xf32>
    %33 = vector.shape_cast %32 : vector<128xf32> to vector<128x1xf32>
    %34 = arith.truncf %26 : vector<128x128xf32> to vector<128x128xbf16>
    %c0_16 = arith.constant 0 : index
    %c0_17 = arith.constant 0 : index
    %35 = vector.load %arg4[%c0_16, %c0_17] : memref<256x256xbf16, #tpu.memory_space<vmem>>, vector<256x256xbf16>
    %cst_18 = arith.constant dense<0.000000e+00> : vector<128x256xf32>
    %36 = tpu.matmul %1, %35, %cst_18 {dimension_numbers = #tpu.dot_dimension_numbers<[1], [0], [0], [1], [0, 0, 1, 1], [], []>} : vector<128x256xbf16>, vector<256x256xbf16>, vector<128x256xf32> -> vector<128x256xf32>
    %37 = vector.broadcast %33 : vector<128x1xf32> to vector<128x256xf32>
    %38 = arith.mulf %37, %36 : vector<128x256xf32>
    %39 = arith.truncf %38 : vector<128x256xf32> to vector<128x256xbf16>
    %cst_19 = arith.constant dense<0.000000e+00> : vector<128x256xf32>
    %40 = tpu.matmul %34, %39, %cst_19 {dimension_numbers = #tpu.dot_dimension_numbers<[0], [0], [1], [1], [0, 1, 1, 1], [], []>} : vector<128x128xbf16>, vector<128x256xbf16>, vector<128x256xf32> -> vector<128x256xf32>
    %41 = vector.broadcast %33 : vector<128x1xf32> to vector<128x256xf32>
    %42 = arith.mulf %41, %40 : vector<128x256xf32>
    %c0_20 = arith.constant 0 : index
    %c0_21 = arith.constant 0 : index
    %43 = vector.load %arg5[%c0_20, %c0_21] : memref<1x256xf32, #tpu.memory_space<vmem>>, vector<1x256xf32>
    %44 = vector.broadcast %43 : vector<1x256xf32> to vector<128x256xf32>
    %45 = arith.addf %42, %44 : vector<128x256xf32>
    %cst_22 = arith.constant 0.000000e+00 : f32
    %46 = vector.broadcast %cst_22 : f32 to vector<128x256xf32>
    %47 = arith.maximumf %45, %46 : vector<128x256xf32>
    %48 = arith.truncf %47 : vector<128x256xf32> to vector<128x256xbf16>
    %c0_23 = arith.constant 0 : index
    %c0_24 = arith.constant 0 : index
    %49 = vector.load %arg6[%c0_23, %c0_24] : memref<256x128xbf16, #tpu.memory_space<vmem>>, vector<256x128xbf16>
    %cst_25 = arith.constant dense<0.000000e+00> : vector<128x128xf32>
    %50 = tpu.matmul %48, %49, %cst_25 {dimension_numbers = #tpu.dot_dimension_numbers<[1], [0], [0], [1], [0, 0, 1, 1], [], []>} : vector<128x256xbf16>, vector<256x128xbf16>, vector<128x128xf32> -> vector<128x128xf32>
    %51 = vector.broadcast %33 : vector<128x1xf32> to vector<128x128xf32>
    %52 = arith.mulf %51, %50 : vector<128x128xf32>
    %53 = arith.truncf %52 : vector<128x128xf32> to vector<128x128xbf16>
    %cst_26 = arith.constant dense<0.000000e+00> : vector<128x128xf32>
    %54 = tpu.matmul %34, %53, %cst_26 {dimension_numbers = #tpu.dot_dimension_numbers<[0], [0], [1], [1], [0, 1, 1, 1], [], []>} : vector<128x128xbf16>, vector<128x128xbf16>, vector<128x128xf32> -> vector<128x128xf32>
    %55 = vector.broadcast %33 : vector<128x1xf32> to vector<128x128xf32>
    %56 = arith.mulf %55, %54 : vector<128x128xf32>
    %c0_27 = arith.constant 0 : index
    %c0_28 = arith.constant 0 : index
    %57 = vector.load %arg7[%c0_27, %c0_28] : memref<1x128xf32, #tpu.memory_space<vmem>>, vector<1x128xf32>
    %58 = vector.broadcast %57 : vector<1x128xf32> to vector<128x128xf32>
    %59 = arith.addf %56, %58 : vector<128x128xf32>
    %cst_29 = arith.constant dense<0.000000e+00> : vector<1xf32>
    %60 = vector.multi_reduction <add>, %6, %cst_29 [0] : vector<128x1xf32> to vector<1xf32>
    %61 = vector.shape_cast %60 : vector<1xf32> to vector<1x1xf32>
    %cst_30 = arith.constant 1.000000e+00 : f32
    %62 = vector.broadcast %cst_30 : f32 to vector<1x1xf32>
    %63 = arith.maximumf %61, %62 : vector<1x1xf32>
    %64 = tpu.reciprocal %63 {approx = true} : vector<1x1xf32> -> vector<1x1xf32>
    %65 = vector.broadcast %6 : vector<128x1xf32> to vector<128x128xf32>
    %66 = arith.mulf %59, %65 : vector<128x128xf32>
    %cst_31 = arith.constant dense<0.000000e+00> : vector<128xf32>
    %67 = vector.multi_reduction <add>, %66, %cst_31 [0] : vector<128x128xf32> to vector<128xf32>
    %68 = vector.shape_cast %67 : vector<128xf32> to vector<1x128xf32>
    %69 = vector.broadcast %64 : vector<1x1xf32> to vector<1x128xf32>
    %70 = arith.mulf %68, %69 : vector<1x128xf32>
    %c0_32 = arith.constant 0 : index
    %c0_33 = arith.constant 0 : index
    %c0_34 = arith.constant 0 : index
    %71 = vector.load %arg8[%c0_32, %c0_33, %c0_34] : memref<1x1x128xf32, #tpu.memory_space<vmem>>, vector<1x1x128xf32>
    %72 = vector.shape_cast %71 : vector<1x1x128xf32> to vector<1x128xf32>
    %73 = vector.shape_cast %70 : vector<1x128xf32> to vector<1x1x128xf32>
    tpu.vector_store %arg8[%c0_32, %c0_33, %c0_34], %73 {strides = array<i32>} : memref<1x1x128xf32, #tpu.memory_space<vmem>>, vector<1x1x128xf32>,
    return
  }
  func.func @transform_0(%arg0: i32) -> (i32, i32, i32) {
    %c0_i32 = arith.constant 0 : i32
    %c0_i32_0 = arith.constant 0 : i32
    %c0_i32_1 = arith.constant 0 : i32
    return %arg0, %c0_i32, %c0_i32_0 : i32, i32, i32
  }
  func.func @transform_1(%arg0: i32) -> (i32, i32, i32) {
    %c0_i32 = arith.constant 0 : i32
    %c0_i32_0 = arith.constant 0 : i32
    %c0_i32_1 = arith.constant 0 : i32
    return %arg0, %c0_i32, %c0_i32_0 : i32, i32, i32
  }
  func.func @transform_2(%arg0: i32) -> (i32, i32, i32) {
    %c0_i32 = arith.constant 0 : i32
    %c0_i32_0 = arith.constant 0 : i32
    %c0_i32_1 = arith.constant 0 : i32
    return %arg0, %c0_i32, %c0_i32_0 : i32, i32, i32
  }
  func.func @transform_3(%arg0: i32) -> (i32, i32) {
    %c0_i32 = arith.constant 0 : i32
    %c0_i32_0 = arith.constant 0 : i32
    %c0_i32_1 = arith.constant 0 : i32
    return %c0_i32, %c0_i32_0 : i32, i32
  }
  func.func @transform_4(%arg0: i32) -> (i32, i32) {
    %c0_i32 = arith.constant 0 : i32
    %c0_i32_0 = arith.constant 0 : i32
    %c0_i32_1 = arith.constant 0 : i32
    return %c0_i32, %c0_i32_0 : i32, i32
  }
  func.func @transform_5(%arg0: i32) -> (i32, i32) {
    %c0_i32 = arith.constant 0 : i32
    %c0_i32_0 = arith.constant 0 : i32
    %c0_i32_1 = arith.constant 0 : i32
    return %c0_i32, %c0_i32_0 : i32, i32
  }
  func.func @transform_6(%arg0: i32) -> (i32, i32) {
    %c0_i32 = arith.constant 0 : i32
    %c0_i32_0 = arith.constant 0 : i32
    %c0_i32_1 = arith.constant 0 : i32
    return %c0_i32, %c0_i32_0 : i32, i32
  }
  func.func @transform_7(%arg0: i32) -> (i32, i32, i32) {
    %c0_i32 = arith.constant 0 : i32
    %c0_i32_0 = arith.constant 0 : i32
    %c0_i32_1 = arith.constant 0 : i32
    return %arg0, %c0_i32, %c0_i32_0 : i32, i32, i32
  }
}

</mosaic_0001>

<llo_original>
// kernel: roberta_gcn_forward.1
$region0: #{roberta_gcn_forward.1}
  #allocation0 [shape = 'u32[]', space=smem, size = 0x4, offset = 0x4, fixed_abs, tag = 'smem constant byte address 0x4 - core index']
  #allocation1 [shape = 'u32[144,128]{1,0:T(1,128)}', space=vmem, size = 0x12000, scoped, tag = 'internal scratch']
  %s0 = inlined_call_operand.vmem [shape: bf16[2,128,256], index: 0, kind: input, shape index: {}]
  %s1 = inlined_call_operand.vmem [shape: bf16[2,256,128], index: 1, kind: input, shape index: {}]
  %s2 = inlined_call_operand.vmem [shape: f32[2,1,128], index: 2, kind: input, shape index: {}]
  %s3 = inlined_call_operand.vmem [shape: bf16[256,256], index: 3, kind: input, shape index: {}]
  %s4 = inlined_call_operand.vmem [shape: f32[1,256], index: 4, kind: input, shape index: {}]
  %s5 = inlined_call_operand.vmem [shape: bf16[256,128], index: 5, kind: input, shape index: {}]
  %s6 = inlined_call_operand.vmem [shape: f32[1,128], index: 6, kind: input, shape index: {}]
  %s7 = inlined_call_operand.vmem [shape: f32[2,1,128], index: 7, kind: output, shape index: {}]
  %s8 = sld [smem:[#allocation0]]
  $region61: #{roberta_gcn_forward.1} parent=0
    _
  %s10 = ssub.s32 1, %s8
  %s11 = scalar_select 0, %s10, %s8
  loop: start=0, step=1, limit=4
  $region2: #{roberta_gcn_forward.1} parent=0 // loop_pre_header
    _
  $region3: #{roberta_gcn_forward.1} parent=0 // loop_header
    %s13 = sphi 0, %s17
    %p14 = scmp.ge.s32.totalorder %s13, 4
    %s23 = sphi 0, %s25
    %s26 = sphi 0, %s23
    %s27 = sphi 0, %s26
    %s43 = sphi 0, %s27
    %s49 = sphi 0, %s51
    %s52 = sphi 0, %s49
    %s53 = sphi 0, %s52
    %s69 = sphi 0, %s53
    %s75 = sphi 0, %s77
    %s78 = sphi 0, %s75
    %s79 = sphi 0, %s78
    %s95 = sphi 0, %s79
    %s99 = sphi 0, %s99
    %s101 = sphi 0, %s99
    %s102 = sphi 0, %s101
    %s116 = sphi 0, %s102
    %s120 = sphi 0, %s120
    %s122 = sphi 0, %s120
    %s123 = sphi 0, %s122
    %s137 = sphi 0, %s123
    %s141 = sphi 0, %s141
    %s143 = sphi 0, %s141
    %s144 = sphi 0, %s143
    %s158 = sphi 0, %s144
    %s162 = sphi 0, %s162
    %s164 = sphi 0, %s162
    %s165 = sphi 0, %s164
    %s179 = sphi 0, %s165
    %s185 = sphi 0, %s187
    %s188 = sphi 0, %s185
    %s189 = sphi 0, %s188
    %s205 = sphi 0, %s189
  $region4: #{roberta_gcn_forward.1} parent=0 // loop_header_branch
    %16 = sbr.rel (%p14) target = $region8
  $region5: #{roberta_gcn_forward.1} parent=0 // loop_body
    %s18 = ssub.s32 %s13, 1
    %s19 = ssub.s32 %s13, 2
    %s20 = sadd.s32 %s13, 1
    %s21 = ssub.s32 %s13, %s20
    %p22 = scmp.eq.s32.totalorder %s21, 0
    %s24 = sadd.s32 %s23, 1
    %s25 = scalar_select %p22, %s23, %s24
    %p28 = pneg %p22
    %p29 = scmp.eq.s32.totalorder %s13, 1
    %p30 = por %p28, %p29
    %p31 = scmp.ne.s32.totalorder %s23, %s26
    %p32 = scmp.eq.s32.totalorder %s13, 0
    %p33 = por %p31, %p32
    %p34 = scmp.ne.s32.totalorder %s23, %s26
    %p35 = scmp.eq.s32.totalorder %s18, 1
    %p36 = por %p34, %p35
    %p37 = scmp.ne.s32.totalorder %s26, %s27
    %p38 = scmp.eq.s32.totalorder %s18, 0
    %p39 = por %p37, %p38
    %p40 = scmp.ne.s32.totalorder %s26, %s27
    %p41 = scmp.eq.s32.totalorder %s19, 1
    %p42 = por %p40, %p41
    %p44 = scmp.ne.s32.totalorder %s27, %s43
    %p45 = scmp.eq.s32.totalorder %s19, 0
    %p46 = por %p44, %p45
    %s47 = ssub.s32 %s13, %s20
    %p48 = scmp.eq.s32.totalorder %s47, 0
    %s50 = sadd.s32 %s49, 1
    %s51 = scalar_select %p48, %s49, %s50
    %p54 = pneg %p48
    %p55 = scmp.eq.s32.totalorder %s13, 1
    %p56 = por %p54, %p55
    %p57 = scmp.ne.s32.totalorder %s49, %s52
    %p58 = scmp.eq.s32.totalorder %s13, 0
    %p59 = por %p57, %p58
    %p60 = scmp.ne.s32.totalorder %s49, %s52
    %p61 = scmp.eq.s32.totalorder %s18, 1
    %p62 = por %p60, %p61
    %p63 = scmp.ne.s32.totalorder %s52, %s53
    %p64 = scmp.eq.s32.totalorder %s18, 0
    %p65 = por %p63, %p64
    %p66 = scmp.ne.s32.totalorder %s52, %s53
    %p67 = scmp.eq.s32.totalorder %s19, 1
    %p68 = por %p66, %p67
    %p70 = scmp.ne.s32.totalorder %s53, %s69
    %p71 = scmp.eq.s32.totalorder %s19, 0
    %p72 = por %p70, %p71
    %s73 = ssub.s32 %s13, %s20
    %p74 = scmp.eq.s32.totalorder %s73, 0
    %s76 = sadd.s32 %s75, 1
    %s77 = scalar_select %p74, %s75, %s76
    %p80 = pneg %p74
    %p81 = scmp.eq.s32.totalorder %s13, 1
    %p82 = por %p80, %p81
    %p83 = scmp.ne.s32.totalorder %s75, %s78
    %p84 = scmp.eq.s32.totalorder %s13, 0
    %p85 = por %p83, %p84
    %p86 = scmp.ne.s32.totalorder %s75, %s78
    %p87 = scmp.eq.s32.totalorder %s18, 1
    %p88 = por %p86, %p87
    %p89 = scmp.ne.s32.totalorder %s78, %s79
    %p90 = scmp.eq.s32.totalorder %s18, 0
    %p91 = por %p89, %p90
    %p92 = scmp.ne.s32.totalorder %s78, %s79
    %p93 = scmp.eq.s32.totalorder %s19, 1
    %p94 = por %p92, %p93
    %p96 = scmp.ne.s32.totalorder %s79, %s95
    %p97 = scmp.eq.s32.totalorder %s19, 0
    %p98 = por %p96, %p97
    %s100 = sadd.s32 %s99, 1
    %p103 = scmp.eq.s32.totalorder %s13, 1
    %p104 = scmp.ne.s32.totalorder %s99, %s101
    %p105 = scmp.eq.s32.totalorder %s13, 0
    %p106 = por %p104, %p105
    %p107 = scmp.ne.s32.totalorder %s99, %s101
    %p108 = scmp.eq.s32.totalorder %s18, 1
    %p109 = por %p107, %p108
    %p110 = scmp.ne.s32.totalorder %s101, %s102
    %p111 = scmp.eq.s32.totalorder %s18, 0
    %p112 = por %p110, %p111
    %p113 = scmp.ne.s32.totalorder %s101, %s102
    %p114 = scmp.eq.s32.totalorder %s19, 1
    %p115 = por %p113, %p114
    %p117 = scmp.ne.s32.totalorder %s102, %s116
    %p118 = scmp.eq.s32.totalorder %s19, 0
    %p119 = por %p117, %p118
    %s121 = sadd.s32 %s120, 1
    %p124 = scmp.eq.s32.totalorder %s13, 1
    %p125 = scmp.ne.s32.totalorder %s120, %s122
    %p126 = scmp.eq.s32.totalorder %s13, 0
    %p127 = por %p125, %p126
    %p128 = scmp.ne.s32.totalorder %s120, %s122
    %p129 = scmp.eq.s32.totalorder %s18, 1
    %p130 = por %p128, %p129
    %p131 = scmp.ne.s32.totalorder %s122, %s123
    %p132 = scmp.eq.s32.totalorder %s18, 0
    %p133 = por %p131, %p132
    %p134 = scmp.ne.s32.totalorder %s122, %s123
    %p135 = scmp.eq.s32.totalorder %s19, 1
    %p136 = por %p134, %p135
    %p138 = scmp.ne.s32.totalorder %s123, %s137
    %p139 = scmp.eq.s32.totalorder %s19, 0
    %p140 = por %p138, %p139
    %s142 = sadd.s32 %s141, 1
    %p145 = scmp.eq.s32.totalorder %s13, 1
    %p146 = scmp.ne.s32.totalorder %s141, %s143
    %p147 = scmp.eq.s32.totalorder %s13, 0
    %p148 = por %p146, %p147
    %p149 = scmp.ne.s32.totalorder %s141, %s143
    %p150 = scmp.eq.s32.totalorder %s18, 1
    %p151 = por %p149, %p150
    %p152 = scmp.ne.s32.totalorder %s143, %s144
    %p153 = scmp.eq.s32.totalorder %s18, 0
    %p154 = por %p152, %p153
    %p155 = scmp.ne.s32.totalorder %s143, %s144
    %p156 = scmp.eq.s32.totalorder %s19, 1
    %p157 = por %p155, %p156
    %p159 = scmp.ne.s32.totalorder %s144, %s158
    %p160 = scmp.eq.s32.totalorder %s19, 0
    %p161 = por %p159, %p160
    %s163 = sadd.s32 %s162, 1
    %p166 = scmp.eq.s32.totalorder %s13, 1
    %p167 = scmp.ne.s32.totalorder %s162, %s164
    %p168 = scmp.eq.s32.totalorder %s13, 0
    %p169 = por %p167, %p168
    %p170 = scmp.ne.s32.totalorder %s162, %s164
    %p171 = scmp.eq.s32.totalorder %s18, 1
    %p172 = por %p170, %p171
    %p173 = scmp.ne.s32.totalorder %s164, %s165
    %p174 = scmp.eq.s32.totalorder %s18, 0
    %p175 = por %p173, %p174
    %p176 = scmp.ne.s32.totalorder %s164, %s165
    %p177 = scmp.eq.s32.totalorder %s19, 1
    %p178 = por %p176, %p177
    %p180 = scmp.ne.s32.totalorder %s165, %s179
    %p181 = scmp.eq.s32.totalorder %s19, 0
    %p182 = por %p180, %p181
    %s183 = ssub.s32 %s13, %s20
    %p184 = scmp.eq.s32.totalorder %s183, 0
    %s186 = sadd.s32 %s185, 1
    %s187 = scalar_select %p184, %s185, %s186
    %p190 = pneg %p184
    %p191 = scmp.eq.s32.totalorder %s13, 1
    %p192 = por %p190, %p191
    %p193 = scmp.ne.s32.totalorder %s185, %s188
    %p194 = scmp.eq.s32.totalorder %s13, 0
    %p195 = por %p193, %p194
    %p196 = scmp.ne.s32.totalorder %s185, %s188
    %p197 = scmp.eq.s32.totalorder %s18, 1
    %p198 = por %p196, %p197
    %p199 = scmp.ne.s32.totalorder %s188, %s189
    %p200 = scmp.eq.s32.totalorder %s18, 0
    %p201 = por %p199, %p200
    %p202 = scmp.ne.s32.totalorder %s188, %s189
    %p203 = scmp.eq.s32.totalorder %s19, 1
    %p204 = por %p202, %p203
    %p206 = scmp.ne.s32.totalorder %s189, %s205
    %p207 = scmp.eq.s32.totalorder %s19, 0
    %p208 = por %p206, %p207
    %p209 = scmp.le.s32.totalorder 1, %s13
    %p210 = scmp.lt.s32.totalorder %s13, 3
    %p211 = pnand %p209, %p210
    %p212 = pneg %p211
    // Predicated region
    $region9: #{roberta_gcn_forward.1} parent=5 // pred_check
      _
    $region10: #{roberta_gcn_forward.1} parent=5 // pred_check_branch
      %214 = sbr.rel (%p211) target = $region12
    $region11: #{roberta_gcn_forward.1} parent=5 // pred_region
      %s215 = ssub.s32 %s13, 1
      // Predicated region
      $region13: #{roberta_gcn_forward.1} parent=11 // pred_check
        %p216 = pneg %p112
      $region14: #{roberta_gcn_forward.1} parent=11 // pred_check_branch
        %218 = sbr.rel (%p216) target = $region16
      $region15: #{roberta_gcn_forward.1} parent=11 // pred_region
        _
      $region16: #{roberta_gcn_forward.1} parent=11 // pred_fallthru
        _
      // Predicated region
      $region17: #{roberta_gcn_forward.1} parent=11 // pred_check
        %p219 = pneg %p133
      $region18: #{roberta_gcn_forward.1} parent=11 // pred_check_branch
        %221 = sbr.rel (%p219) target = $region20
      $region19: #{roberta_gcn_forward.1} parent=11 // pred_region
        _
      $region20: #{roberta_gcn_forward.1} parent=11 // pred_fallthru
        _
      // Predicated region
      $region21: #{roberta_gcn_forward.1} parent=11 // pred_check
        %p222 = pneg %p154
      $region22: #{roberta_gcn_forward.1} parent=11 // pred_check_branch
        %224 = sbr.rel (%p222) target = $region24
      $region23: #{roberta_gcn_forward.1} parent=11 // pred_region
        _
      $region24: #{roberta_gcn_forward.1} parent=11 // pred_fallthru
        _
      // Predicated region
      $region25: #{roberta_gcn_forward.1} parent=11 // pred_check
        %p225 = pneg %p175
      $region26: #{roberta_gcn_forward.1} parent=11 // pred_check_branch
        %227 = sbr.rel (%p225) target = $region28
      $region27: #{roberta_gcn_forward.1} parent=11 // pred_region
        _
      $region28: #{roberta_gcn_forward.1} parent=11 // pred_fallthru
        _
    $region12: #{roberta_gcn_forward.1} parent=5 // pred_fallthru
      _
    %p228 = scmp.lt.s32.totalorder %s13, 2
    // Predicated region
    $region29: #{roberta_gcn_forward.1} parent=5 // pred_check
      %p229 = pneg %p228
    $region30: #{roberta_gcn_forward.1} parent=5 // pred_check_branch
      %231 = sbr.rel (%p229) target = $region32
    $region31: #{roberta_gcn_forward.1} parent=5 // pred_region
      // Predicated region
      $region33: #{roberta_gcn_forward.1} parent=31 // pred_check
        %p232 = pneg %p33
      $region34: #{roberta_gcn_forward.1} parent=31 // pred_check_branch
        %234 = sbr.rel (%p232) target = $region36
      $region35: #{roberta_gcn_forward.1} parent=31 // pred_region
        %p235 = scmp.lt.s32.totalorder %s13, 1
        %s236 = scalar_select %p235, %s13, 1
        %s237 = smul.addr %s236, 32
        %s238 = smul.addr %s237, 4
        %s239 = scalar_lea.vmem %s0, %s238
      $region36: #{roberta_gcn_forward.1} parent=31 // pred_fallthru
        _
      // Predicated region
      $region37: #{roberta_gcn_forward.1} parent=31 // pred_check
        %p240 = pneg %p59
      $region38: #{roberta_gcn_forward.1} parent=31 // pred_check_branch
        %242 = sbr.rel (%p240) target = $region40
      $region39: #{roberta_gcn_forward.1} parent=31 // pred_region
        %p243 = scmp.lt.s32.totalorder %s13, 1
        %s244 = scalar_select %p243, %s13, 1
        %s245 = smul.addr %s244, 32
        %s246 = smul.addr %s245, 4
        %s247 = scalar_lea.vmem %s1, %s246
      $region40: #{roberta_gcn_forward.1} parent=31 // pred_fallthru
        _
      // Predicated region
      $region41: #{roberta_gcn_forward.1} parent=31 // pred_check
        %p248 = pneg %p85
      $region42: #{roberta_gcn_forward.1} parent=31 // pred_check_branch
        %250 = sbr.rel (%p248) target = $region44
      $region43: #{roberta_gcn_forward.1} parent=31 // pred_region
        %p251 = scmp.lt.s32.totalorder %s13, 1
        %s252 = scalar_select %p251, %s13, 1
        %s253 = scalar_lea.vmem %s2, %s252
      $region44: #{roberta_gcn_forward.1} parent=31 // pred_fallthru
        _
    $region32: #{roberta_gcn_forward.1} parent=5 // pred_fallthru
      _
    %p254 = scmp.le.s32.totalorder 1, %s13
    %p255 = scmp.lt.s32.totalorder %s13, 3
    %p256 = pnand %p254, %p255
    %p257 = pneg %p256
    // Predicated region
    $region45: #{roberta_gcn_forward.1} parent=5 // pred_check
      _
    $region46: #{roberta_gcn_forward.1} parent=5 // pred_check_branch
      %259 = sbr.rel (%p256) target = $region48
    $region47: #{roberta_gcn_forward.1} parent=5 // pred_region
      %s260 = ssub.s32 %s13, 1
      %p261 = scmp.lt.s32.totalorder %s18, 1
      %s262 = scalar_select %p261, %s18, 1
      %s263 = smul.addr %s262, 32
      %s264 = smul.addr %s263, 4
      %s265 = scalar_lea.vmem %s0, %s264
      %p266 = pneg %p39
      %p267 = pneg %p36
      %p268 = scmp.lt.s32.totalorder %s18, 1
      %s269 = scalar_select %p268, %s18, 1
      %s270 = smul.addr %s269, 32
      %s271 = smul.addr %s270, 4
      %s272 = scalar_lea.vmem %s1, %s271
      %p273 = pneg %p65
      %p274 = pneg %p62
      %p275 = scmp.lt.s32.totalorder %s18, 1
      %s276 = scalar_select %p275, %s18, 1
      %s277 = scalar_lea.vmem %s2, %s276
      %p278 = pneg %p91
      %p279 = pneg %p88
      %p280 = pneg %p112
      %p281 = pneg %p109
      %p282 = pneg %p133
      %p283 = pneg %p130
      %p284 = pneg %p154
      %p285 = pneg %p151
      %p286 = pneg %p175
      %p287 = pneg %p172
      %p288 = pneg %p201
      %p289 = pneg %p198
      %p290 = scmp.lt.s32.totalorder %s18, 1
      %s291 = scalar_select %p290, %s18, 1
      %s292 = scalar_lea.vmem %s7, %s291
      %p293 = scmp.lt.s32.totalorder %s18, 1
      %s294 = scalar_select %p293, %s18, 1
      %s295 = smul.addr %s294, 32
      %s296 = smul.addr %s295, 4
      %s297 = scalar_lea.vmem %s0, %s296
      %p298 = scmp.lt.s32.totalorder %s18, 1
      %s299 = scalar_select %p298, %s18, 1
      %s300 = smul.addr %s299, 32
      %s301 = smul.addr %s300, 4
      %s302 = scalar_lea.vmem %s1, %s301
      %p303 = scmp.lt.s32.totalorder %s18, 1
      %s304 = scalar_select %p303, %s18, 1
      %s305 = scalar_lea.vmem %s2, %s304
      %p306 = scmp.lt.s32.totalorder %s18, 1
      %s307 = scalar_select %p306, %s18, 1
      %s308 = scalar_lea.vmem %s7, %s307
      %v310 = vld [vmem:[%s297] sm:$0xff]
      %v311 = vld [vmem:[%s297 + $0x8] sm:$0xff]
      %v312 = vld [vmem:[%s297 + $0x10] sm:$0xff]
      %v313 = vld [vmem:[%s297 + $0x18] sm:$0xff]
      %v314 = vld [vmem:[%s297 + $0x20] sm:$0xff]
      %v315 = vld [vmem:[%s297 + $0x28] sm:$0xff]
      %v316 = vld [vmem:[%s297 + $0x30] sm:$0xff]
      %v317 = vld [vmem:[%s297 + $0x38] sm:$0xff]
      %v318 = vld [vmem:[%s297 + $0x40] sm:$0xff]
      %v319 = vld [vmem:[%s297 + $0x48] sm:$0xff]
      %v320 = vld [vmem:[%s297 + $0x50] sm:$0xff]
      %v321 = vld [vmem:[%s297 + $0x58] sm:$0xff]
      %v322 = vld [vmem:[%s297 + $0x60] sm:$0xff]
      %v323 = vld [vmem:[%s297 + $0x68] sm:$0xff]
      %v324 = vld [vmem:[%s297 + $0x70] sm:$0xff]
      %v325 = vld [vmem:[%s297 + $0x78] sm:$0xff]
      %v326 = vld [vmem:[%s302] sm:$0xf]
      %v327 = vld [vmem:[%s302 + $0x4] sm:$0xf]
      %v328 = vld [vmem:[%s302 + $0x8] sm:$0xf]
      %v329 = vld [vmem:[%s302 + $0xc] sm:$0xf]
      %v330 = vld [vmem:[%s302 + $0x10] sm:$0xf]
      %v331 = vld [vmem:[%s302 + $0x14] sm:$0xf]
      %v332 = vld [vmem:[%s302 + $0x18] sm:$0xf]
      %v333 = vld [vmem:[%s302 + $0x1c] sm:$0xf]
      %v334 = vld [vmem:[%s302 + $0x20] sm:$0xf]
      %v335 = vld [vmem:[%s302 + $0x24] sm:$0xf]
      %v336 = vld [vmem:[%s302 + $0x28] sm:$0xf]
      %v337 = vld [vmem:[%s302 + $0x2c] sm:$0xf]
      %v338 = vld [vmem:[%s302 + $0x30] sm:$0xf]
      %v339 = vld [vmem:[%s302 + $0x34] sm:$0xf]
      %v340 = vld [vmem:[%s302 + $0x38] sm:$0xf]
      %v341 = vld [vmem:[%s302 + $0x3c] sm:$0xf]
      %v342 = vld [vmem:[%s302 + $0x40] sm:$0xf]
      %v343 = vld [vmem:[%s302 + $0x44] sm:$0xf]
      %v344 = vld [vmem:[%s302 + $0x48] sm:$0xf]
      %v345 = vld [vmem:[%s302 + $0x4c] sm:$0xf]
      %v346 = vld [vmem:[%s302 + $0x50] sm:$0xf]
      %v347 = vld [vmem:[%s302 + $0x54] sm:$0xf]
      %v348 = vld [vmem:[%s302 + $0x58] sm:$0xf]
      %v349 = vld [vmem:[%s302 + $0x5c] sm:$0xf]
      %v350 = vld [vmem:[%s302 + $0x60] sm:$0xf]
      %v351 = vld [vmem:[%s302 + $0x64] sm:$0xf]
      %v352 = vld [vmem:[%s302 + $0x68] sm:$0xf]
      %v353 = vld [vmem:[%s302 + $0x6c] sm:$0xf]
      %v354 = vld [vmem:[%s302 + $0x70] sm:$0xf]
      %v355 = vld [vmem:[%s302 + $0x74] sm:$0xf]
      %v356 = vld [vmem:[%s302 + $0x78] sm:$0xf]
      %v357 = vld [vmem:[%s302 + $0x7c] sm:$0xf]
      %v358 = vld [vmem:[%s305] sm:$0x1]
      %v359 = vlaneseq
      %v360 = vshrl.u32 %v359, 7
      %v361 = vsub.s32 0, %v360
      %v362 = vrot.slane %v358, %v361
      %364 = vbcast.lane.b32.xlu0 %v362, 256
      %v365 = vpop.permute.xlu0 %364
      %s367 = sor.u32 256, 8
      %368 = vbcast.lane.b32.xlu0 %v362, %s367
      %v369 = vpop.permute.xlu0 %368
      %s371 = sor.u32 256, 16
      %372 = vbcast.lane.b32.xlu0 %v362, %s371
      %v373 = vpop.permute.xlu0 %372
      %s375 = sor.u32 256, 24
      %376 = vbcast.lane.b32.xlu0 %v362, %s375
      %v377 = vpop.permute.xlu0 %376
      %s379 = sor.u32 256, 32
      %380 = vbcast.lane.b32.xlu0 %v362, %s379
      %v381 = vpop.permute.xlu0 %380
      %s383 = sor.u32 256, 40
      %384 = vbcast.lane.b32.xlu0 %v362, %s383
      %v385 = vpop.permute.xlu0 %384
      %s387 = sor.u32 256, 48
      %388 = vbcast.lane.b32.xlu0 %v362, %s387
      %v389 = vpop.permute.xlu0 %388
      %s391 = sor.u32 256, 56
      %392 = vbcast.lane.b32.xlu0 %v362, %s391
      %v393 = vpop.permute.xlu0 %392
      %s395 = sor.u32 256, 64
      %396 = vbcast.lane.b32.xlu0 %v362, %s395
      %v397 = vpop.permute.xlu0 %396
      %s399 = sor.u32 256, 72
      %400 = vbcast.lane.b32.xlu0 %v362, %s399
      %v401 = vpop.permute.xlu0 %400
      %s403 = sor.u32 256, 80
      %404 = vbcast.lane.b32.xlu0 %v362, %s403
      %v405 = vpop.permute.xlu0 %404
      %s407 = sor.u32 256, 88
      %408 = vbcast.lane.b32.xlu0 %v362, %s407
      %v409 = vpop.permute.xlu0 %408
      %s411 = sor.u32 256, 96
      %412 = vbcast.lane.b32.xlu0 %v362, %s411
      %v413 = vpop.permute.xlu0 %412
      %s415 = sor.u32 256, 104
      %416 = vbcast.lane.b32.xlu0 %v362, %s415
      %v417 = vpop.permute.xlu0 %416
      %s419 = sor.u32 256, 112
      %420 = vbcast.lane.b32.xlu0 %v362, %s419
      %v421 = vpop.permute.xlu0 %420
      %s423 = sor.u32 256, 120
      %424 = vbcast.lane.b32.xlu0 %v362, %s423
      %v425 = vpop.permute.xlu0 %424
      %v442 = vunpack.c.l.b16 %v310
      %v443 = vunpack.c.h.b16 %v310
      %v444 = vunpack.c.l.b16 %v311
      %v445 = vunpack.c.h.b16 %v311
      %v446 = vunpack.c.l.b16 %v312
      %v447 = vunpack.c.h.b16 %v312
      %v448 = vunpack.c.l.b16 %v313
      %v449 = vunpack.c.h.b16 %v313
      %v450 = vunpack.c.l.b16 %v314
      %v451 = vunpack.c.h.b16 %v314
      %v452 = vunpack.c.l.b16 %v315
      %v453 = vunpack.c.h.b16 %v315
      %v454 = vunpack.c.l.b16 %v316
      %v455 = vunpack.c.h.b16 %v316
      %v456 = vunpack.c.l.b16 %v317
      %v457 = vunpack.c.h.b16 %v317
      %v458 = vunpack.c.l.b16 %v318
      %v459 = vunpack.c.h.b16 %v318
      %v460 = vunpack.c.l.b16 %v319
      %v461 = vunpack.c.h.b16 %v319
      %v462 = vunpack.c.l.b16 %v320
      %v463 = vunpack.c.h.b16 %v320
      %v464 = vunpack.c.l.b16 %v321
      %v465 = vunpack.c.h.b16 %v321
      %v466 = vunpack.c.l.b16 %v322
      %v467 = vunpack.c.h.b16 %v322
      %v468 = vunpack.c.l.b16 %v323
      %v469 = vunpack.c.h.b16 %v323
      %v470 = vunpack.c.l.b16 %v324
      %v471 = vunpack.c.h.b16 %v324
      %v472 = vunpack.c.l.b16 %v325
      %v473 = vunpack.c.h.b16 %v325
      %v474 = vpack.c.b16 %v444, %v442
      %v475 = vpack.c.b16 %v445, %v443
      %v476 = vpack.c.b16 %v448, %v446
      %v477 = vpack.c.b16 %v449, %v447
      %v478 = vpack.c.b16 %v452, %v450
      %v479 = vpack.c.b16 %v453, %v451
      %v480 = vpack.c.b16 %v456, %v454
      %v481 = vpack.c.b16 %v457, %v455
      %v482 = vpack.c.b16 %v460, %v458
      %v483 = vpack.c.b16 %v461, %v459
      %v484 = vpack.c.b16 %v464, %v462
      %v485 = vpack.c.b16 %v465, %v463
      %v486 = vpack.c.b16 %v468, %v466
      %v487 = vpack.c.b16 %v469, %v467
      %v488 = vpack.c.b16 %v472, %v470
      %v489 = vpack.c.b16 %v473, %v471
      %v538 = vunpack.c.l.b16 %v326
      %v539 = vunpack.c.l.b16 %v327
      %v540 = vunpack.c.l.b16 %v328
      %v541 = vunpack.c.l.b16 %v329
      %v542 = vunpack.c.l.b16 %v330
      %v543 = vunpack.c.l.b16 %v331
      %v544 = vunpack.c.l.b16 %v332
      %v545 = vunpack.c.l.b16 %v333
      %v546 = vunpack.c.l.b16 %v334
      %v547 = vunpack.c.l.b16 %v335
      %v548 = vunpack.c.l.b16 %v336
      %v549 = vunpack.c.l.b16 %v337
      %v550 = vunpack.c.l.b16 %v338
      %v551 = vunpack.c.l.b16 %v339
      %v552 = vunpack.c.l.b16 %v340
      %v553 = vunpack.c.l.b16 %v341
      %v554 = vunpack.c.l.b16 %v342
      %v555 = vunpack.c.l.b16 %v343
      %v556 = vunpack.c.l.b16 %v344
      %v557 = vunpack.c.l.b16 %v345
      %v558 = vunpack.c.l.b16 %v346
      %v559 = vunpack.c.l.b16 %v347
      %v560 = vunpack.c.l.b16 %v348
      %v561 = vunpack.c.l.b16 %v349
      %v562 = vunpack.c.l.b16 %v350
      %v563 = vunpack.c.l.b16 %v351
      %v564 = vunpack.c.l.b16 %v352
      %v565 = vunpack.c.l.b16 %v353
      %v566 = vunpack.c.l.b16 %v354
      %v567 = vunpack.c.l.b16 %v355
      %v568 = vunpack.c.l.b16 %v356
      %v569 = vunpack.c.l.b16 %v357
      %v570 = vpack.c.b16 %v539, %v538
      %v571 = vpack.c.b16 %v541, %v540
      %v572 = vpack.c.b16 %v543, %v542
      %v573 = vpack.c.b16 %v545, %v544
      %v574 = vpack.c.b16 %v547, %v546
      %v575 = vpack.c.b16 %v549, %v548
      %v576 = vpack.c.b16 %v551, %v550
      %v577 = vpack.c.b16 %v553, %v552
      %v578 = vpack.c.b16 %v555, %v554
      %v579 = vpack.c.b16 %v557, %v556
      %v580 = vpack.c.b16 %v559, %v558
      %v581 = vpack.c.b16 %v561, %v560
      %v582 = vpack.c.b16 %v563, %v562
      %v583 = vpack.c.b16 %v565, %v564
      %v584 = vpack.c.b16 %v567, %v566
      %v585 = vpack.c.b16 %v569, %v568
      %602 = vmatprep.subr.bf16.mxu0 0
      %603 = vmatpush1.bf16.msra.mxu0 %v570
      %604 = vmatprep.subr.bf16.mxu0 0
      %605 = vmatpush1.bf16.msra.mxu0 %v571
      %606 = vmatprep.subr.bf16.mxu0 0
      %607 = vmatpush1.bf16.msra.mxu0 %v572
      %608 = vmatprep.subr.bf16.mxu0 0
      %609 = vmatpush1.bf16.msra.mxu0 %v573
      %610 = vmatprep.subr.bf16.mxu0 0
      %611 = vmatpush1.bf16.msra.mxu0 %v574
      %612 = vmatprep.subr.bf16.mxu0 0
      %613 = vmatpush1.bf16.msra.mxu0 %v575
      %614 = vmatprep.subr.bf16.mxu0 0
      %615 = vmatpush1.bf16.msra.mxu0 %v576
      %616 = vmatprep.subr.bf16.mxu0 0
      %617 = vmatpush1.bf16.msra.mxu0 %v577
      %618 = vmatprep.subr.bf16.mxu0 0
      %619 = vmatpush1.bf16.msra.mxu0 %v578
      %620 = vmatprep.subr.bf16.mxu0 0
      %621 = vmatpush1.bf16.msra.mxu0 %v579
      %622 = vmatprep.subr.bf16.mxu0 0
      %623 = vmatpush1.bf16.msra.mxu0 %v580
      %624 = vmatprep.subr.bf16.mxu0 0
      %625 = vmatpush1.bf16.msra.mxu0 %v581
      %626 = vmatprep.subr.bf16.mxu0 0
      %627 = vmatpush1.bf16.msra.mxu0 %v582
      %628 = vmatprep.subr.bf16.mxu0 0
      %629 = vmatpush1.bf16.msra.mxu0 %v583
      %630 = vmatprep.subr.bf16.mxu0 0
      %631 = vmatpush1.bf16.msra.mxu0 %v584
      %632 = vmatprep.subr.bf16.mxu0 0
      %633 = vmatpush1.bf16.msra.mxu0 %v585
      %634 = vmatprep.mubr.bf16.mxu0 %v475
      %635 = vmatmul.mubr.bf16.gmra.mrb[0].mxu0 %v474
      %v636 = vpop.f32.mrb[0].mxu0
      %v637 = vadd.f32 0.0, %v636
      %v638 = vpop.f32.mrb[0].mxu0
      %v639 = vpop.f32.mrb[0].mxu0
      %v640 = vadd.f32 0.0, %v639
      %v641 = vpop.f32.mrb[0].mxu0
      %642 = vmatprep.mubr.bf16.mxu0 %v477
      %643 = vmatmul.mubr.bf16.gmra.mrb[0].mxu0 %v476
      %v644 = vpop.f32.mrb[0].mxu0
      %v645 = vadd.f32 0.0, %v644
      %v646 = vpop.f32.mrb[0].mxu0
      %v647 = vpop.f32.mrb[0].mxu0
      %v648 = vadd.f32 0.0, %v647
      %v649 = vpop.f32.mrb[0].mxu0
      %650 = vmatprep.mubr.bf16.mxu0 %v479
      %651 = vmatmul.mubr.bf16.gmra.mrb[0].mxu0 %v478
      %v652 = vpop.f32.mrb[0].mxu0
      %v653 = vadd.f32 0.0, %v652
      %v654 = vpop.f32.mrb[0].mxu0
      %v655 = vpop.f32.mrb[0].mxu0
      %v656 = vadd.f32 0.0, %v655
      %v657 = vpop.f32.mrb[0].mxu0
      %658 = vmatprep.mubr.bf16.mxu0 %v481
      %659 = vmatmul.mubr.bf16.gmra.mrb[0].mxu0 %v480
      %v660 = vpop.f32.mrb[0].mxu0
      %v661 = vadd.f32 0.0, %v660
      %v662 = vpop.f32.mrb[0].mxu0
      %v663 = vpop.f32.mrb[0].mxu0
      %v664 = vadd.f32 0.0, %v663
      %v665 = vpop.f32.mrb[0].mxu0
      %666 = vmatprep.mubr.bf16.mxu0 %v483
      %667 = vmatmul.mubr.bf16.gmra.mrb[0].mxu0 %v482
      %v668 = vpop.f32.mrb[0].mxu0
      %v669 = vadd.f32 0.0, %v668
      %v670 = vpop.f32.mrb[0].mxu0
      %v671 = vpop.f32.mrb[0].mxu0
      %v672 = vadd.f32 0.0, %v671
      %v673 = vpop.f32.mrb[0].mxu0
      %674 = vmatprep.mubr.bf16.mxu0 %v485
      %675 = vmatmul.mubr.bf16.gmra.mrb[0].mxu0 %v484
      %v676 = vpop.f32.mrb[0].mxu0
      %v677 = vadd.f32 0.0, %v676
      %v678 = vpop.f32.mrb[0].mxu0
      %v679 = vpop.f32.mrb[0].mxu0
      %v680 = vadd.f32 0.0, %v679
      %v681 = vpop.f32.mrb[0].mxu0
      %682 = vmatprep.mubr.bf16.mxu0 %v487
      %683 = vmatmul.mubr.bf16.gmra.mrb[0].mxu0 %v486
      %v684 = vpop.f32.mrb[0].mxu0
      %v685 = vadd.f32 0.0, %v684
      %v686 = vpop.f32.mrb[0].mxu0
      %v687 = vpop.f32.mrb[0].mxu0
      %v688 = vadd.f32 0.0, %v687
      %v689 = vpop.f32.mrb[0].mxu0
      %690 = vmatprep.mubr.bf16.mxu0 %v489
      %691 = vmatmul.mubr.bf16.gmra.mrb[0].mxu0 %v488
      %v692 = vpop.f32.mrb[0].mxu0
      %v693 = vadd.f32 0.0, %v692
      %v694 = vpop.f32.mrb[0].mxu0
      %v695 = vpop.f32.mrb[0].mxu0
      %v696 = vadd.f32 0.0, %v695
      %v697 = vpop.f32.mrb[0].mxu0
      %698 = vdwg.mxu0
      %699 = vmax.xlane.f32.xlu0 %v637
      %v700 = vpop.xlane.xlu0 %699
      %701 = vmax.xlane.f32.xlu0 %v640
      %v702 = vpop.xlane.xlu0 %701
      %703 = vmax.xlane.f32.xlu0 %v645
      %v704 = vpop.xlane.xlu0 %703
      %705 = vmax.xlane.f32.xlu0 %v648
      %v706 = vpop.xlane.xlu0 %705
      %707 = vmax.xlane.f32.xlu0 %v653
      %v708 = vpop.xlane.xlu0 %707
      %709 = vmax.xlane.f32.xlu0 %v656
      %v710 = vpop.xlane.xlu0 %709
      %711 = vmax.xlane.f32.xlu0 %v661
      %v712 = vpop.xlane.xlu0 %711
      %713 = vmax.xlane.f32.xlu0 %v664
      %v714 = vpop.xlane.xlu0 %713
      %715 = vmax.xlane.f32.xlu0 %v669
      %v716 = vpop.xlane.xlu0 %715
      %717 = vmax.xlane.f32.xlu0 %v672
      %v718 = vpop.xlane.xlu0 %717
      %719 = vmax.xlane.f32.xlu0 %v677
      %v720 = vpop.xlane.xlu0 %719
      %721 = vmax.xlane.f32.xlu0 %v680
      %v722 = vpop.xlane.xlu0 %721
      %723 = vmax.xlane.f32.xlu0 %v685
      %v724 = vpop.xlane.xlu0 %723
      %725 = vmax.xlane.f32.xlu0 %v688
      %v726 = vpop.xlane.xlu0 %725
      %727 = vmax.xlane.f32.xlu0 %v693
      %v728 = vpop.xlane.xlu0 %727
      %729 = vmax.xlane.f32.xlu0 %v696
      %v730 = vpop.xlane.xlu0 %729
      %v731 = vsub.f32 %v637, %v700
      %v732 = vsub.f32 %v640, %v702
      %v733 = vsub.f32 %v645, %v704
      %v734 = vsub.f32 %v648, %v706
      %v735 = vsub.f32 %v653, %v708
      %v736 = vsub.f32 %v656, %v710
      %v737 = vsub.f32 %v661, %v712
      %v738 = vsub.f32 %v664, %v714
      %v739 = vsub.f32 %v669, %v716
      %v740 = vsub.f32 %v672, %v718
      %v741 = vsub.f32 %v677, %v720
      %v742 = vsub.f32 %v680, %v722
      %v743 = vsub.f32 %v685, %v724
      %v744 = vsub.f32 %v688, %v726
      %v745 = vsub.f32 %v693, %v728
      %v746 = vsub.f32 %v696, %v730
      %v747 = vmul.f32 %v731, 1.442695
      %v748 = vpow.pop %v747
      %v749 = vmul.f32 %v732, 1.442695
      %v750 = vpow.pop %v749
      %v751 = vmul.f32 %v733, 1.442695
      %v752 = vpow.pop %v751
      %v753 = vmul.f32 %v734, 1.442695
      %v754 = vpow.pop %v753
      %v755 = vmul.f32 %v735, 1.442695
      %v756 = vpow.pop %v755
      %v757 = vmul.f32 %v736, 1.442695
      %v758 = vpow.pop %v757
      %v759 = vmul.f32 %v737, 1.442695
      %v760 = vpow.pop %v759
      %v761 = vmul.f32 %v738, 1.442695
      %v762 = vpow.pop %v761
      %v763 = vmul.f32 %v739, 1.442695
      %v764 = vpow.pop %v763
      %v765 = vmul.f32 %v740, 1.442695
      %v766 = vpow.pop %v765
      %v767 = vmul.f32 %v741, 1.442695
      %v768 = vpow.pop %v767
      %v769 = vmul.f32 %v742, 1.442695
      %v770 = vpow.pop %v769
      %v771 = vmul.f32 %v743, 1.442695
      %v772 = vpow.pop %v771
      %v773 = vmul.f32 %v744, 1.442695
      %v774 = vpow.pop %v773
      %v775 = vmul.f32 %v745, 1.442695
      %v776 = vpow.pop %v775
      %v777 = vmul.f32 %v746, 1.442695
      %v778 = vpow.pop %v777
      %779 = vadd.xlane.f32.xlu0 %v748
      %v780 = vpop.xlane.xlu0 %779
      %781 = vadd.xlane.f32.xlu0 %v750
      %v782 = vpop.xlane.xlu0 %781
      %783 = vadd.xlane.f32.xlu0 %v752
      %v784 = vpop.xlane.xlu0 %783
      %785 = vadd.xlane.f32.xlu0 %v754
      %v786 = vpop.xlane.xlu0 %785
      %787 = vadd.xlane.f32.xlu0 %v756
      %v788 = vpop.xlane.xlu0 %787
      %789 = vadd.xlane.f32.xlu0 %v758
      %v790 = vpop.xlane.xlu0 %789
      %791 = vadd.xlane.f32.xlu0 %v760
      %v792 = vpop.xlane.xlu0 %791
      %793 = vadd.xlane.f32.xlu0 %v762
      %v794 = vpop.xlane.xlu0 %793
      %795 = vadd.xlane.f32.xlu0 %v764
      %v796 = vpop.xlane.xlu0 %795
      %797 = vadd.xlane.f32.xlu0 %v766
      %v798 = vpop.xlane.xlu0 %797
      %799 = vadd.xlane.f32.xlu0 %v768
      %v800 = vpop.xlane.xlu0 %799
      %801 = vadd.xlane.f32.xlu0 %v770
      %v802 = vpop.xlane.xlu0 %801
      %803 = vadd.xlane.f32.xlu0 %v772
      %v804 = vpop.xlane.xlu0 %803
      %805 = vadd.xlane.f32.xlu0 %v774
      %v806 = vpop.xlane.xlu0 %805
      %807 = vadd.xlane.f32.xlu0 %v776
      %v808 = vpop.xlane.xlu0 %807
      %809 = vadd.xlane.f32.xlu0 %v778
      %v810 = vpop.xlane.xlu0 %809
      %v811 = vrcp.pop %v780
      %v812 = vrcp.pop %v782
      %v813 = vrcp.pop %v784
      %v814 = vrcp.pop %v786
      %v815 = vrcp.pop %v788
      %v816 = vrcp.pop %v790
      %v817 = vrcp.pop %v792
      %v818 = vrcp.pop %v794
      %v819 = vrcp.pop %v796
      %v820 = vrcp.pop %v798
      %v821 = vrcp.pop %v800
      %v822 = vrcp.pop %v802
      %v823 = vrcp.pop %v804
      %v824 = vrcp.pop %v806
      %v825 = vrcp.pop %v808
      %v826 = vrcp.pop %v810
      %v827 = vmul.f32 %v748, %v811
      %v828 = vmul.f32 %v750, %v812
      %v829 = vmul.f32 %v752, %v813
      %v830 = vmul.f32 %v754, %v814
      %v831 = vmul.f32 %v756, %v815
      %v832 = vmul.f32 %v758, %v816
      %v833 = vmul.f32 %v760, %v817
      %v834 = vmul.f32 %v762, %v818
      %v835 = vmul.f32 %v764, %v819
      %v836 = vmul.f32 %v766, %v820
      %v837 = vmul.f32 %v768, %v821
      %v838 = vmul.f32 %v770, %v822
      %v839 = vmul.f32 %v772, %v823
      %v840 = vmul.f32 %v774, %v824
      %v841 = vmul.f32 %v776, %v825
      %v842 = vmul.f32 %v778, %v826
      %vm843 = vcmp.gt.f32.partialorder %v827, 0.1
      %vm844 = vcmp.gt.f32.partialorder %v828, 0.1
      %vm845 = vcmp.gt.f32.partialorder %v829, 0.1
      %vm846 = vcmp.gt.f32.partialorder %v830, 0.1
      %vm847 = vcmp.gt.f32.partialorder %v831, 0.1
      %vm848 = vcmp.gt.f32.partialorder %v832, 0.1
      %vm849 = vcmp.gt.f32.partialorder %v833, 0.1
      %vm850 = vcmp.gt.f32.partialorder %v834, 0.1
      %vm851 = vcmp.gt.f32.partialorder %v835, 0.1
      %vm852 = vcmp.gt.f32.partialorder %v836, 0.1
      %vm853 = vcmp.gt.f32.partialorder %v837, 0.1
      %vm854 = vcmp.gt.f32.partialorder %v838, 0.1
      %vm855 = vcmp.gt.f32.partialorder %v839, 0.1
      %vm856 = vcmp.gt.f32.partialorder %v840, 0.1
      %vm857 = vcmp.gt.f32.partialorder %v841, 0.1
      %vm858 = vcmp.gt.f32.partialorder %v842, 0.1
      %v859 = vlaneseq
      %v860 = vshrl.u32 %v859, 7
      %v861 = vadd.s32 %v860, 8
      %v862 = vadd.s32 %v860, 16
      %v863 = vadd.s32 %v860, 24
      %v864 = vadd.s32 %v860, 32
      %v865 = vadd.s32 %v860, 40
      %v866 = vadd.s32 %v860, 48
      %v867 = vadd.s32 %v860, 56
      %v868 = vadd.s32 %v860, 64
      %v869 = vadd.s32 %v860, 72
      %v870 = vadd.s32 %v860, 80
      %v871 = vadd.s32 %v860, 88
      %v872 = vadd.s32 %v860, 96
      %v873 = vadd.s32 %v860, 104
      %v874 = vadd.s32 %v860, 112
      %v875 = vadd.s32 %v860, 120
      %v876 = vlaneseq
      %v877 = vand.u32 %v876, 127
      %vm878 = vcmp.eq.s32.totalorder %v860, %v877
      %vm879 = vcmp.eq.s32.totalorder %v861, %v877
      %vm880 = vcmp.eq.s32.totalorder %v862, %v877
      %vm881 = vcmp.eq.s32.totalorder %v863, %v877
      %vm882 = vcmp.eq.s32.totalorder %v864, %v877
      %vm883 = vcmp.eq.s32.totalorder %v865, %v877
      %vm884 = vcmp.eq.s32.totalorder %v866, %v877
      %vm885 = vcmp.eq.s32.totalorder %v867, %v877
      %vm886 = vcmp.eq.s32.totalorder %v868, %v877
      %vm887 = vcmp.eq.s32.totalorder %v869, %v877
      %vm888 = vcmp.eq.s32.totalorder %v870, %v877
      %vm889 = vcmp.eq.s32.totalorder %v871, %v877
      %vm890 = vcmp.eq.s32.totalorder %v872, %v877
      %vm891 = vcmp.eq.s32.totalorder %v873, %v877
      %vm892 = vcmp.eq.s32.totalorder %v874, %v877
      %vm893 = vcmp.eq.s32.totalorder %v875, %v877
      %v894 = vsel %vm878, 1.0, 0.0
      %v895 = vsel %vm879, 1.0, 0.0
      %v896 = vsel %vm880, 1.0, 0.0
      %v897 = vsel %vm881, 1.0, 0.0
      %v898 = vsel %vm882, 1.0, 0.0
      %v899 = vsel %vm883, 1.0, 0.0
      %v900 = vsel %vm884, 1.0, 0.0
      %v901 = vsel %vm885, 1.0, 0.0
      %v902 = vsel %vm886, 1.0, 0.0
      %v903 = vsel %vm887, 1.0, 0.0
      %v904 = vsel %vm888, 1.0, 0.0
      %v905 = vsel %vm889, 1.0, 0.0
      %v906 = vsel %vm890, 1.0, 0.0
      %v907 = vsel %vm891, 1.0, 0.0
      %v908 = vsel %vm892, 1.0, 0.0
      %v909 = vsel %vm893, 1.0, 0.0
      %v910 = vsel %vm843, %v827, %v894
      %v911 = vsel %vm844, %v828, %v895
      %v912 = vsel %vm845, %v829, %v896
      %v913 = vsel %vm846, %v830, %v897
      %v914 = vsel %vm847, %v831, %v898
      %v915 = vsel %vm848, %v832, %v899
      %v916 = vsel %vm849, %v833, %v900
      %v917 = vsel %vm850, %v834, %v901
      %v918 = vsel %vm851, %v835, %v902
      %v919 = vsel %vm852, %v836, %v903
      %v920 = vsel %vm853, %v837, %v904
      %v921 = vsel %vm854, %v838, %v905
      %v922 = vsel %vm855, %v839, %v906
      %v923 = vsel %vm856, %v840, %v907
      %v924 = vsel %vm857, %v841, %v908
      %v925 = vsel %vm858, %v842, %v909
      %v926 = vadd.f32 %v910, %v911
      %v927 = vadd.f32 %v926, %v912
      %v928 = vadd.f32 %v927, %v913
      %v929 = vadd.f32 %v928, %v914
      %v930 = vadd.f32 %v929, %v915
      %v931 = vadd.f32 %v930, %v916
      %v932 = vadd.f32 %v931, %v917
      %v933 = vadd.f32 %v932, %v918
      %v934 = vadd.f32 %v933, %v919
      %v935 = vadd.f32 %v934, %v920
      %v936 = vadd.f32 %v935, %v921
      %v937 = vadd.f32 %v936, %v922
      %v938 = vadd.f32 %v937, %v923
      %v939 = vadd.f32 %v938, %v924
      %v940 = vadd.f32 %v939, %v925
      %v941 = vrot.slane %v940, 4
      %v942 = vadd.f32 %v940, %v941
      %v943 = vrot.slane %v942, 2
      %v944 = vadd.f32 %v942, %v943
      %v945 = vrot.slane %v944, 1
      %v946 = vadd.f32 %v944, %v945
      %vm947 = vcmp.gt.f32.partialorder %v946, 0.0
      %v948 = vrsqrt.pop %v946
      %v949 = vsel %vm947, %v948, 0.0
      %951 = vbcast.lane.b32.xlu0 %v949, 256
      %v952 = vpop.permute.xlu0 %951
      %s954 = sor.u32 256, 8
      %955 = vbcast.lane.b32.xlu0 %v949, %s954
      %v956 = vpop.permute.xlu0 %955
      %s958 = sor.u32 256, 16
      %959 = vbcast.lane.b32.xlu0 %v949, %s958
      %v960 = vpop.permute.xlu0 %959
      %s962 = sor.u32 256, 24
      %963 = vbcast.lane.b32.xlu0 %v949, %s962
      %v964 = vpop.permute.xlu0 %963
      %s966 = sor.u32 256, 32
      %967 = vbcast.lane.b32.xlu0 %v949, %s966
      %v968 = vpop.permute.xlu0 %967
      %s970 = sor.u32 256, 40
      %971 = vbcast.lane.b32.xlu0 %v949, %s970
      %v972 = vpop.permute.xlu0 %971
      %s974 = sor.u32 256, 48
      %975 = vbcast.lane.b32.xlu0 %v949, %s974
      %v976 = vpop.permute.xlu0 %975
      %s978 = sor.u32 256, 56
      %979 = vbcast.lane.b32.xlu0 %v949, %s978
      %v980 = vpop.permute.xlu0 %979
      %s982 = sor.u32 256, 64
      %983 = vbcast.lane.b32.xlu0 %v949, %s982
      %v984 = vpop.permute.xlu0 %983
      %s986 = sor.u32 256, 72
      %987 = vbcast.lane.b32.xlu0 %v949, %s986
      %v988 = vpop.permute.xlu0 %987
      %s990 = sor.u32 256, 80
      %991 = vbcast.lane.b32.xlu0 %v949, %s990
      %v992 = vpop.permute.xlu0 %991
      %s994 = sor.u32 256, 88
      %995 = vbcast.lane.b32.xlu0 %v949, %s994
      %v996 = vpop.permute.xlu0 %995
      %s998 = sor.u32 256, 96
      %999 = vbcast.lane.b32.xlu0 %v949, %s998
      %v1000 = vpop.permute.xlu0 %999
      %s1002 = sor.u32 256, 104
      %1003 = vbcast.lane.b32.xlu0 %v949, %s1002
      %v1004 = vpop.permute.xlu0 %1003
      %s1006 = sor.u32 256, 112
      %1007 = vbcast.lane.b32.xlu0 %v949, %s1006
      %v1008 = vpop.permute.xlu0 %1007
      %s1010 = sor.u32 256, 120
      %1011 = vbcast.lane.b32.xlu0 %v949, %s1010
      %v1012 = vpop.permute.xlu0 %1011
      %v1013 = vpack.c.bf16 %v911, %v910
      %v1014 = vpack.c.bf16 %v913, %v912
      %v1015 = vpack.c.bf16 %v915, %v914
      %v1016 = vpack.c.bf16 %v917, %v916
      %v1017 = vpack.c.bf16 %v919, %v918
      %v1018 = vpack.c.bf16 %v921, %v920
      %v1019 = vpack.c.bf16 %v923, %v922
      %v1020 = vpack.c.bf16 %v925, %v924
      %v1021 = vld [vmem:[%s3] sm:$0xff]
      %v1022 = vld [vmem:[%s3 + $0x8] sm:$0xff]
      %v1023 = vld [vmem:[%s3 + $0x10] sm:$0xff]
      %v1024 = vld [vmem:[%s3 + $0x18] sm:$0xff]
      %v1025 = vld [vmem:[%s3 + $0x20] sm:$0xff]
      %v1026 = vld [vmem:[%s3 + $0x28] sm:$0xff]
      %v1027 = vld [vmem:[%s3 + $0x30] sm:$0xff]
      %v1028 = vld [vmem:[%s3 + $0x38] sm:$0xff]
      %v1029 = vld [vmem:[%s3 + $0x40] sm:$0xff]
      %v1030 = vld [vmem:[%s3 + $0x48] sm:$0xff]
      %v1031 = vld [vmem:[%s3 + $0x50] sm:$0xff]
      %v1032 = vld [vmem:[%s3 + $0x58] sm:$0xff]
      %v1033 = vld [vmem:[%s3 + $0x60] sm:$0xff]
      %v1034 = vld [vmem:[%s3 + $0x68] sm:$0xff]
      %v1035 = vld [vmem:[%s3 + $0x70] sm:$0xff]
      %v1036 = vld [vmem:[%s3 + $0x78] sm:$0xff]
      %v1037 = vld [vmem:[%s3 + $0x80] sm:$0xff]
      %v1038 = vld [vmem:[%s3 + $0x88] sm:$0xff]
      %v1039 = vld [vmem:[%s3 + $0x90] sm:$0xff]
      %v1040 = vld [vmem:[%s3 + $0x98] sm:$0xff]
      %v1041 = vld [vmem:[%s3 + $0xa0] sm:$0xff]
      %v1042 = vld [vmem:[%s3 + $0xa8] sm:$0xff]
      %v1043 = vld [vmem:[%s3 + $0xb0] sm:$0xff]
      %v1044 = vld [vmem:[%s3 + $0xb8] sm:$0xff]
      %v1045 = vld [vmem:[%s3 + $0xc0] sm:$0xff]
      %v1046 = vld [vmem:[%s3 + $0xc8] sm:$0xff]
      %v1047 = vld [vmem:[%s3 + $0xd0] sm:$0xff]
      %v1048 = vld [vmem:[%s3 + $0xd8] sm:$0xff]
      %v1049 = vld [vmem:[%s3 + $0xe0] sm:$0xff]
      %v1050 = vld [vmem:[%s3 + $0xe8] sm:$0xff]
      %v1051 = vld [vmem:[%s3 + $0xf0] sm:$0xff]
      %v1052 = vld [vmem:[%s3 + $0xf8] sm:$0xff]
      %v1085 = vunpack.c.l.b16 %v1021
      %v1086 = vunpack.c.h.b16 %v1021
      %v1087 = vunpack.c.l.b16 %v1022
      %v1088 = vunpack.c.h.b16 %v1022
      %v1089 = vunpack.c.l.b16 %v1023
      %v1090 = vunpack.c.h.b16 %v1023
      %v1091 = vunpack.c.l.b16 %v1024
      %v1092 = vunpack.c.h.b16 %v1024
      %v1093 = vunpack.c.l.b16 %v1025
      %v1094 = vunpack.c.h.b16 %v1025
      %v1095 = vunpack.c.l.b16 %v1026
      %v1096 = vunpack.c.h.b16 %v1026
      %v1097 = vunpack.c.l.b16 %v1027
      %v1098 = vunpack.c.h.b16 %v1027
      %v1099 = vunpack.c.l.b16 %v1028
      %v1100 = vunpack.c.h.b16 %v1028
      %v1101 = vunpack.c.l.b16 %v1029
      %v1102 = vunpack.c.h.b16 %v1029
      %v1103 = vunpack.c.l.b16 %v1030
      %v1104 = vunpack.c.h.b16 %v1030
      %v1105 = vunpack.c.l.b16 %v1031
      %v1106 = vunpack.c.h.b16 %v1031
      %v1107 = vunpack.c.l.b16 %v1032
      %v1108 = vunpack.c.h.b16 %v1032
      %v1109 = vunpack.c.l.b16 %v1033
      %v1110 = vunpack.c.h.b16 %v1033
      %v1111 = vunpack.c.l.b16 %v1034
      %v1112 = vunpack.c.h.b16 %v1034
      %v1113 = vunpack.c.l.b16 %v1035
      %v1114 = vunpack.c.h.b16 %v1035
      %v1115 = vunpack.c.l.b16 %v1036
      %v1116 = vunpack.c.h.b16 %v1036
      %v1117 = vunpack.c.l.b16 %v1037
      %v1118 = vunpack.c.h.b16 %v1037
      %v1119 = vunpack.c.l.b16 %v1038
      %v1120 = vunpack.c.h.b16 %v1038
      %v1121 = vunpack.c.l.b16 %v1039
      %v1122 = vunpack.c.h.b16 %v1039
      %v1123 = vunpack.c.l.b16 %v1040
      %v1124 = vunpack.c.h.b16 %v1040
      %v1125 = vunpack.c.l.b16 %v1041
      %v1126 = vunpack.c.h.b16 %v1041
      %v1127 = vunpack.c.l.b16 %v1042
      %v1128 = vunpack.c.h.b16 %v1042
      %v1129 = vunpack.c.l.b16 %v1043
      %v1130 = vunpack.c.h.b16 %v1043
      %v1131 = vunpack.c.l.b16 %v1044
      %v1132 = vunpack.c.h.b16 %v1044
      %v1133 = vunpack.c.l.b16 %v1045
      %v1134 = vunpack.c.h.b16 %v1045
      %v1135 = vunpack.c.l.b16 %v1046
      %v1136 = vunpack.c.h.b16 %v1046
      %v1137 = vunpack.c.l.b16 %v1047
      %v1138 = vunpack.c.h.b16 %v1047
      %v1139 = vunpack.c.l.b16 %v1048
      %v1140 = vunpack.c.h.b16 %v1048
      %v1141 = vunpack.c.l.b16 %v1049
      %v1142 = vunpack.c.h.b16 %v1049
      %v1143 = vunpack.c.l.b16 %v1050
      %v1144 = vunpack.c.h.b16 %v1050
      %v1145 = vunpack.c.l.b16 %v1051
      %v1146 = vunpack.c.h.b16 %v1051
      %v1147 = vunpack.c.l.b16 %v1052
      %v1148 = vunpack.c.h.b16 %v1052
      %v1149 = vpack.c.b16 %v1087, %v1085
      %v1150 = vpack.c.b16 %v1088, %v1086
      %v1151 = vpack.c.b16 %v1091, %v1089
      %v1152 = vpack.c.b16 %v1092, %v1090
      %v1153 = vpack.c.b16 %v1095, %v1093
      %v1154 = vpack.c.b16 %v1096, %v1094
      %v1155 = vpack.c.b16 %v1099, %v1097
      %v1156 = vpack.c.b16 %v1100, %v1098
      %v1157 = vpack.c.b16 %v1103, %v1101
      %v1158 = vpack.c.b16 %v1104, %v1102
      %v1159 = vpack.c.b16 %v1107, %v1105
      %v1160 = vpack.c.b16 %v1108, %v1106
      %v1161 = vpack.c.b16 %v1111, %v1109
      %v1162 = vpack.c.b16 %v1112, %v1110
      %v1163 = vpack.c.b16 %v1115, %v1113
      %v1164 = vpack.c.b16 %v1116, %v1114
      %v1165 = vpack.c.b16 %v1119, %v1117
      %v1166 = vpack.c.b16 %v1120, %v1118
      %v1167 = vpack.c.b16 %v1123, %v1121
      %v1168 = vpack.c.b16 %v1124, %v1122
      %v1169 = vpack.c.b16 %v1127, %v1125
      %v1170 = vpack.c.b16 %v1128, %v1126
      %v1171 = vpack.c.b16 %v1131, %v1129
      %v1172 = vpack.c.b16 %v1132, %v1130
      %v1173 = vpack.c.b16 %v1135, %v1133
      %v1174 = vpack.c.b16 %v1136, %v1134
      %v1175 = vpack.c.b16 %v1139, %v1137
      %v1176 = vpack.c.b16 %v1140, %v1138
      %v1177 = vpack.c.b16 %v1143, %v1141
      %v1178 = vpack.c.b16 %v1144, %v1142
      %v1179 = vpack.c.b16 %v1147, %v1145
      %v1180 = vpack.c.b16 %v1148, %v1146
      %1213 = vmatprep.subr.bf16.mxu0 %v1150
      %1214 = vmatpush1.bf16.msra.mxu0 %v1149
      %1215 = vmatprep.subr.bf16.mxu0 %v1152
      %1216 = vmatpush1.bf16.msra.mxu0 %v1151
      %1217 = vmatprep.subr.bf16.mxu0 %v1154
      %1218 = vmatpush1.bf16.msra.mxu0 %v1153
      %1219 = vmatprep.subr.bf16.mxu0 %v1156
      %1220 = vmatpush1.bf16.msra.mxu0 %v1155
      %1221 = vmatprep.subr.bf16.mxu0 %v1158
      %1222 = vmatpush1.bf16.msra.mxu0 %v1157
      %1223 = vmatprep.subr.bf16.mxu0 %v1160
      %1224 = vmatpush1.bf16.msra.mxu0 %v1159
      %1225 = vmatprep.subr.bf16.mxu0 %v1162
      %1226 = vmatpush1.bf16.msra.mxu0 %v1161
      %1227 = vmatprep.subr.bf16.mxu0 %v1164
      %1228 = vmatpush1.bf16.msra.mxu0 %v1163
      %1229 = vmatprep.subr.bf16.mxu0 %v1166
      %1230 = vmatpush1.bf16.msra.mxu0 %v1165
      %1231 = vmatprep.subr.bf16.mxu0 %v1168
      %1232 = vmatpush1.bf16.msra.mxu0 %v1167
      %1233 = vmatprep.subr.bf16.mxu0 %v1170
      %1234 = vmatpush1.bf16.msra.mxu0 %v1169
      %1235 = vmatprep.subr.bf16.mxu0 %v1172
      %1236 = vmatpush1.bf16.msra.mxu0 %v1171
      %1237 = vmatprep.subr.bf16.mxu0 %v1174
      %1238 = vmatpush1.bf16.msra.mxu0 %v1173
      %1239 = vmatprep.subr.bf16.mxu0 %v1176
      %1240 = vmatpush1.bf16.msra.mxu0 %v1175
      %1241 = vmatprep.subr.bf16.mxu0 %v1178
      %1242 = vmatpush1.bf16.msra.mxu0 %v1177
      %1243 = vmatprep.subr.bf16.mxu0 %v1180
      %1244 = vmatpush1.bf16.msra.mxu0 %v1179
      %1245 = vmatprep.mubr.bf16.mxu0 %v475
      %1246 = vmatmul.mubr.bf16.gmra.mrb[0].mxu0 %v474
      %v1247 = vpop.f32.mrb[0].mxu0
      %v1248 = vadd.f32 0.0, %v1247
      %v1249 = vpop.f32.mrb[0].mxu0
      %v1250 = vadd.f32 0.0, %v1249
      %v1251 = vpop.f32.mrb[0].mxu0
      %v1252 = vadd.f32 0.0, %v1251
      %v1253 = vpop.f32.mrb[0].mxu0
      %v1254 = vadd.f32 0.0, %v1253
      %1255 = vmatprep.mubr.bf16.mxu0 %v477
      %1256 = vmatmul.mubr.bf16.gmra.mrb[0].mxu0 %v476
      %v1257 = vpop.f32.mrb[0].mxu0
      %v1258 = vadd.f32 0.0, %v1257
      %v1259 = vpop.f32.mrb[0].mxu0
      %v1260 = vadd.f32 0.0, %v1259
      %v1261 = vpop.f32.mrb[0].mxu0
      %v1262 = vadd.f32 0.0, %v1261
      %v1263 = vpop.f32.mrb[0].mxu0
      %v1264 = vadd.f32 0.0, %v1263
      %1265 = vmatprep.mubr.bf16.mxu0 %v479
      %1266 = vmatmul.mubr.bf16.gmra.mrb[0].mxu0 %v478
      %v1267 = vpop.f32.mrb[0].mxu0
      %v1268 = vadd.f32 0.0, %v1267
      %v1269 = vpop.f32.mrb[0].mxu0
      %v1270 = vadd.f32 0.0, %v1269
      %v1271 = vpop.f32.mrb[0].mxu0
      %v1272 = vadd.f32 0.0, %v1271
      %v1273 = vpop.f32.mrb[0].mxu0
      %v1274 = vadd.f32 0.0, %v1273
      %1275 = vmatprep.mubr.bf16.mxu0 %v481
      %1276 = vmatmul.mubr.bf16.gmra.mrb[0].mxu0 %v480
      %v1277 = vpop.f32.mrb[0].mxu0
      %v1278 = vadd.f32 0.0, %v1277
      %v1279 = vpop.f32.mrb[0].mxu0
      %v1280 = vadd.f32 0.0, %v1279
      %v1281 = vpop.f32.mrb[0].mxu0
      %v1282 = vadd.f32 0.0, %v1281
      %v1283 = vpop.f32.mrb[0].mxu0
      %v1284 = vadd.f32 0.0, %v1283
      %1285 = vmatprep.mubr.bf16.mxu0 %v483
      %1286 = vmatmul.mubr.bf16.gmra.mrb[0].mxu0 %v482
      %v1287 = vpop.f32.mrb[0].mxu0
      %v1288 = vadd.f32 0.0, %v1287
      %v1289 = vpop.f32.mrb[0].mxu0
      %v1290 = vadd.f32 0.0, %v1289
      %v1291 = vpop.f32.mrb[0].mxu0
      %v1292 = vadd.f32 0.0, %v1291
      %v1293 = vpop.f32.mrb[0].mxu0
      %v1294 = vadd.f32 0.0, %v1293
      %1295 = vmatprep.mubr.bf16.mxu0 %v485
      %1296 = vmatmul.mubr.bf16.gmra.mrb[0].mxu0 %v484
      %v1297 = vpop.f32.mrb[0].mxu0
      %v1298 = vadd.f32 0.0, %v1297
      %v1299 = vpop.f32.mrb[0].mxu0
      %v1300 = vadd.f32 0.0, %v1299
      %v1301 = vpop.f32.mrb[0].mxu0
      %v1302 = vadd.f32 0.0, %v1301
      %v1303 = vpop.f32.mrb[0].mxu0
      %v1304 = vadd.f32 0.0, %v1303
      %1305 = vmatprep.mubr.bf16.mxu0 %v487
      %1306 = vmatmul.mubr.bf16.gmra.mrb[0].mxu0 %v486
      %v1307 = vpop.f32.mrb[0].mxu0
      %v1308 = vadd.f32 0.0, %v1307
      %v1309 = vpop.f32.mrb[0].mxu0
      %v1310 = vadd.f32 0.0, %v1309
      %v1311 = vpop.f32.mrb[0].mxu0
      %v1312 = vadd.f32 0.0, %v1311
      %v1313 = vpop.f32.mrb[0].mxu0
      %v1314 = vadd.f32 0.0, %v1313
      %1315 = vmatprep.mubr.bf16.mxu0 %v489
      %1316 = vmatmul.mubr.bf16.gmra.mrb[0].mxu0 %v488
      %v1317 = vpop.f32.mrb[0].mxu0
      %v1318 = vadd.f32 0.0, %v1317
      %v1319 = vpop.f32.mrb[0].mxu0
      %v1320 = vadd.f32 0.0, %v1319
      %v1321 = vpop.f32.mrb[0].mxu0
      %v1322 = vadd.f32 0.0, %v1321
      %v1323 = vpop.f32.mrb[0].mxu0
      %v1324 = vadd.f32 0.0, %v1323
      %1325 = vdwg.mxu0
      %v1326 = vmul.f32 %v952, %v1248
      %v1327 = vmul.f32 %v952, %v1250
      %v1328 = vmul.f32 %v956, %v1252
      %v1329 = vmul.f32 %v956, %v1254
      %v1330 = vmul.f32 %v960, %v1258
      %v1331 = vmul.f32 %v960, %v1260
      %v1332 = vmul.f32 %v964, %v1262
      %v1333 = vmul.f32 %v964, %v1264
      %v1334 = vmul.f32 %v968, %v1268
      %v1335 = vmul.f32 %v968, %v1270
      %v1336 = vmul.f32 %v972, %v1272
      %v1337 = vmul.f32 %v972, %v1274
      %v1338 = vmul.f32 %v976, %v1278
      %v1339 = vmul.f32 %v976, %v1280
      %v1340 = vmul.f32 %v980, %v1282
      %v1341 = vmul.f32 %v980, %v1284
      %v1342 = vmul.f32 %v984, %v1288
      %v1343 = vmul.f32 %v984, %v1290
      %v1344 = vmul.f32 %v988, %v1292
      %v1345 = vmul.f32 %v988, %v1294
      %v1346 = vmul.f32 %v992, %v1298
      %v1347 = vmul.f32 %v992, %v1300
      %v1348 = vmul.f32 %v996, %v1302
      %v1349 = vmul.f32 %v996, %v1304
      %v1350 = vmul.f32 %v1000, %v1308
      %v1351 = vmul.f32 %v1000, %v1310
      %v1352 = vmul.f32 %v1004, %v1312
      %v1353 = vmul.f32 %v1004, %v1314
      %v1354 = vmul.f32 %v1008, %v1318
      %v1355 = vmul.f32 %v1008, %v1320
      %v1356 = vmul.f32 %v1012, %v1322
      %v1357 = vmul.f32 %v1012, %v1324
      %v1358 = vpack.c.bf16 %v1328, %v1326
      %v1359 = vpack.c.bf16 %v1329, %v1327
      %v1360 = vpack.c.bf16 %v1332, %v1330
      %v1361 = vpack.c.bf16 %v1333, %v1331
      %v1362 = vpack.c.bf16 %v1336, %v1334
      %v1363 = vpack.c.bf16 %v1337, %v1335
      %v1364 = vpack.c.bf16 %v1340, %v1338
      %v1365 = vpack.c.bf16 %v1341, %v1339
      %v1366 = vpack.c.bf16 %v1344, %v1342
      %v1367 = vpack.c.bf16 %v1345, %v1343
      %v1368 = vpack.c.bf16 %v1348, %v1346
      %v1369 = vpack.c.bf16 %v1349, %v1347
      %v1370 = vpack.c.bf16 %v1352, %v1350
      %v1371 = vpack.c.bf16 %v1353, %v1351
      %v1372 = vpack.c.bf16 %v1356, %v1354
      %v1373 = vpack.c.bf16 %v1357, %v1355
      %1374 = vxpose.xlu0.c.b16.start [1/8] %v1013, 128
      %1375 = vxpose.xlu0.c.b16.cont [2/8] %v1014, 128
      %1376 = vxpose.xlu0.c.b16.cont [3/8] %v1015, 128
      %1377 = vxpose.xlu0.c.b16.cont [4/8] %v1016, 128
      %1378 = vxpose.xlu0.c.b16.cont [5/8] %v1017, 128
      %1379 = vxpose.xlu0.c.b16.cont [6/8] %v1018, 128
      %1380 = vxpose.xlu0.c.b16.cont [7/8] %v1019, 128
      %1381 = vxpose.xlu0.c.b16.end [8/8] %v1020, 128
      %v1382 = vpop.trf.xlu0
      %v1383 = vpop.trf.xlu0
      %v1384 = vpop.trf.xlu0
      %v1385 = vpop.trf.xlu0
      %v1386 = vpop.trf.xlu0
      %v1387 = vpop.trf.xlu0
      %v1388 = vpop.trf.xlu0
      %v1389 = vpop.trf.xlu0
      %1390 = vmatprep.subr.bf16.mxu0 %v1359
      %1391 = vmatpush1.bf16.msra.mxu0 %v1358
      %1392 = vmatprep.subr.bf16.mxu0 %v1361
      %1393 = vmatpush1.bf16.msra.mxu0 %v1360
      %1394 = vmatprep.subr.bf16.mxu0 %v1363
      %1395 = vmatpush1.bf16.msra.mxu0 %v1362
      %1396 = vmatprep.subr.bf16.mxu0 %v1365
      %1397 = vmatpush1.bf16.msra.mxu0 %v1364
      %1398 = vmatprep.subr.bf16.mxu0 %v1367
      %1399 = vmatpush1.bf16.msra.mxu0 %v1366
      %1400 = vmatprep.subr.bf16.mxu0 %v1369
      %1401 = vmatpush1.bf16.msra.mxu0 %v1368
      %1402 = vmatprep.subr.bf16.mxu0 %v1371
      %1403 = vmatpush1.bf16.msra.mxu0 %v1370
      %1404 = vmatprep.subr.bf16.mxu0 %v1373
      %1405 = vmatpush1.bf16.msra.mxu0 %v1372
      %1406 = vmatprep.subr.bf16.mxu0 0
      %1407 = vmatpush1.bf16.msra.mxu0 0
      %1408 = vmatprep.subr.bf16.mxu0 0
      %1409 = vmatpush1.bf16.msra.mxu0 0
      %1410 = vmatprep.subr.bf16.mxu0 0
      %1411 = vmatpush1.bf16.msra.mxu0 0
      %1412 = vmatprep.subr.bf16.mxu0 0
      %1413 = vmatpush1.bf16.msra.mxu0 0
      %1414 = vmatprep.subr.bf16.mxu0 0
      %1415 = vmatpush1.bf16.msra.mxu0 0
      %1416 = vmatprep.subr.bf16.mxu0 0
      %1417 = vmatpush1.bf16.msra.mxu0 0
      %1418 = vmatprep.subr.bf16.mxu0 0
      %1419 = vmatpush1.bf16.msra.mxu0 0
      %1420 = vmatprep.subr.bf16.mxu0 0
      %1421 = vmatpush1.bf16.msra.mxu0 0
      %1422 = vmatprep.mubr.bf16.mxu0 0
      %1423 = vmatmul.mubr.bf16.gmra.mrb[0].mxu0 %v1382
      %v1424 = vpop.f32.mrb[0].mxu0
      %v1425 = vadd.f32 0.0, %v1424
      %v1426 = vpop.f32.mrb[0].mxu0
      %v1427 = vadd.f32 0.0, %v1426
      %v1428 = vpop.f32.mrb[0].mxu0
      %v1429 = vadd.f32 0.0, %v1428
      %v1430 = vpop.f32.mrb[0].mxu0
      %v1431 = vadd.f32 0.0, %v1430
      %1432 = vmatprep.mubr.bf16.mxu0 0
      %1433 = vmatmul.mubr.bf16.gmra.mrb[0].mxu0 %v1383
      %v1434 = vpop.f32.mrb[0].mxu0
      %v1435 = vadd.f32 0.0, %v1434
      %v1436 = vpop.f32.mrb[0].mxu0
      %v1437 = vadd.f32 0.0, %v1436
      %v1438 = vpop.f32.mrb[0].mxu0
      %v1439 = vadd.f32 0.0, %v1438
      %v1440 = vpop.f32.mrb[0].mxu0
      %v1441 = vadd.f32 0.0, %v1440
      %1442 = vmatprep.mubr.bf16.mxu0 0
      %1443 = vmatmul.mubr.bf16.gmra.mrb[0].mxu0 %v1384
      %v1444 = vpop.f32.mrb[0].mxu0
      %v1445 = vadd.f32 0.0, %v1444
      %v1446 = vpop.f32.mrb[0].mxu0
      %v1447 = vadd.f32 0.0, %v1446
      %v1448 = vpop.f32.mrb[0].mxu0
      %v1449 = vadd.f32 0.0, %v1448
      %v1450 = vpop.f32.mrb[0].mxu0
      %v1451 = vadd.f32 0.0, %v1450
      %1452 = vmatprep.mubr.bf16.mxu0 0
      %1453 = vmatmul.mubr.bf16.gmra.mrb[0].mxu0 %v1385
      %v1454 = vpop.f32.mrb[0].mxu0
      %v1455 = vadd.f32 0.0, %v1454
      %v1456 = vpop.f32.mrb[0].mxu0
      %v1457 = vadd.f32 0.0, %v1456
      %v1458 = vpop.f32.mrb[0].mxu0
      %v1459 = vadd.f32 0.0, %v1458
      %v1460 = vpop.f32.mrb[0].mxu0
      %v1461 = vadd.f32 0.0, %v1460
      %1462 = vmatprep.mubr.bf16.mxu0 0
      %1463 = vmatmul.mubr.bf16.gmra.mrb[0].mxu0 %v1386
      %v1464 = vpop.f32.mrb[0].mxu0
      %v1465 = vadd.f32 0.0, %v1464
      %v1466 = vpop.f32.mrb[0].mxu0
      %v1467 = vadd.f32 0.0, %v1466
      %v1468 = vpop.f32.mrb[0].mxu0
      %v1469 = vadd.f32 0.0, %v1468
      %v1470 = vpop.f32.mrb[0].mxu0
      %v1471 = vadd.f32 0.0, %v1470
      %1472 = vmatprep.mubr.bf16.mxu0 0
      %1473 = vmatmul.mubr.bf16.gmra.mrb[0].mxu0 %v1387
      %v1474 = vpop.f32.mrb[0].mxu0
      %v1475 = vadd.f32 0.0, %v1474
      %v1476 = vpop.f32.mrb[0].mxu0
      %v1477 = vadd.f32 0.0, %v1476
      %v1478 = vpop.f32.mrb[0].mxu0
      %v1479 = vadd.f32 0.0, %v1478
      %v1480 = vpop.f32.mrb[0].mxu0
      %v1481 = vadd.f32 0.0, %v1480
      %1482 = vmatprep.mubr.bf16.mxu0 0
      %1483 = vmatmul.mubr.bf16.gmra.mrb[0].mxu0 %v1388
      %v1484 = vpop.f32.mrb[0].mxu0
      %v1485 = vadd.f32 0.0, %v1484
      %v1486 = vpop.f32.mrb[0].mxu0
      %v1487 = vadd.f32 0.0, %v1486
      %v1488 = vpop.f32.mrb[0].mxu0
      %v1489 = vadd.f32 0.0, %v1488
      %v1490 = vpop.f32.mrb[0].mxu0
      %v1491 = vadd.f32 0.0, %v1490
      %1492 = vmatprep.mubr.bf16.mxu0 0
      %1493 = vmatmul.mubr.bf16.gmra.mrb[0].mxu0 %v1389
      %v1494 = vpop.f32.mrb[0].mxu0
      %v1495 = vadd.f32 0.0, %v1494
      %v1496 = vpop.f32.mrb[0].mxu0
      %v1497 = vadd.f32 0.0, %v1496
      %v1498 = vpop.f32.mrb[0].mxu0
      %v1499 = vadd.f32 0.0, %v1498
      %v1500 = vpop.f32.mrb[0].mxu0
      %v1501 = vadd.f32 0.0, %v1500
      %1502 = vdwg.mxu0
      %v1503 = vmul.f32 %v952, %v1425
      %v1504 = vmul.f32 %v952, %v1427
      %v1505 = vmul.f32 %v956, %v1429
      %v1506 = vmul.f32 %v956, %v1431
      %v1507 = vmul.f32 %v960, %v1435
      %v1508 = vmul.f32 %v960, %v1437
      %v1509 = vmul.f32 %v964, %v1439
      %v1510 = vmul.f32 %v964, %v1441
      %v1511 = vmul.f32 %v968, %v1445
      %v1512 = vmul.f32 %v968, %v1447
      %v1513 = vmul.f32 %v972, %v1449
      %v1514 = vmul.f32 %v972, %v1451
      %v1515 = vmul.f32 %v976, %v1455
      %v1516 = vmul.f32 %v976, %v1457
      %v1517 = vmul.f32 %v980, %v1459
      %v1518 = vmul.f32 %v980, %v1461
      %v1519 = vmul.f32 %v984, %v1465
      %v1520 = vmul.f32 %v984, %v1467
      %v1521 = vmul.f32 %v988, %v1469
      %v1522 = vmul.f32 %v988, %v1471
      %v1523 = vmul.f32 %v992, %v1475
      %v1524 = vmul.f32 %v992, %v1477
      %v1525 = vmul.f32 %v996, %v1479
      %v1526 = vmul.f32 %v996, %v1481
      %v1527 = vmul.f32 %v1000, %v1485
      %v1528 = vmul.f32 %v1000, %v1487
      %v1529 = vmul.f32 %v1004, %v1489
      %v1530 = vmul.f32 %v1004, %v1491
      %v1531 = vmul.f32 %v1008, %v1495
      %v1532 = vmul.f32 %v1008, %v1497
      %v1533 = vmul.f32 %v1012, %v1499
      %v1534 = vmul.f32 %v1012, %v1501
      %v1535 = vld [vmem:[%s4] sm:$0x3]
      %v1537 = vlaneseq
      %v1538 = vshrl.u32 %v1537, 7
      %v1539 = vsub.s32 0, %v1538
      %v1540 = vrot.slane %v1535, %v1539
      %v1541 = vlaneseq
      %v1542 = vshrl.u32 %v1541, 7
      %v1543 = vsub.s32 1, %v1542
      %v1544 = vrot.slane %v1535, %v1543
      %v1547 = vadd.f32 %v1503, %v1540
      %v1548 = vadd.f32 %v1504, %v1544
      %v1549 = vadd.f32 %v1505, %v1540
      %v1550 = vadd.f32 %v1506, %v1544
      %v1551 = vadd.f32 %v1507, %v1540
      %v1552 = vadd.f32 %v1508, %v1544
      %v1553 = vadd.f32 %v1509, %v1540
      %v1554 = vadd.f32 %v1510, %v1544
      %v1555 = vadd.f32 %v1511, %v1540
      %v1556 = vadd.f32 %v1512, %v1544
      %v1557 = vadd.f32 %v1513, %v1540
      %v1558 = vadd.f32 %v1514, %v1544
      %v1559 = vadd.f32 %v1515, %v1540
      %v1560 = vadd.f32 %v1516, %v1544
      %v1561 = vadd.f32 %v1517, %v1540
      %v1562 = vadd.f32 %v1518, %v1544
      %v1563 = vadd.f32 %v1519, %v1540
      %v1564 = vadd.f32 %v1520, %v1544
      %v1565 = vadd.f32 %v1521, %v1540
      %v1566 = vadd.f32 %v1522, %v1544
      %v1567 = vadd.f32 %v1523, %v1540
      %v1568 = vadd.f32 %v1524, %v1544
      %v1569 = vadd.f32 %v1525, %v1540
      %v1570 = vadd.f32 %v1526, %v1544
      %v1571 = vadd.f32 %v1527, %v1540
      %v1572 = vadd.f32 %v1528, %v1544
      %v1573 = vadd.f32 %v1529, %v1540
      %v1574 = vadd.f32 %v1530, %v1544
      %v1575 = vadd.f32 %v1531, %v1540
      %v1576 = vadd.f32 %v1532, %v1544
      %v1577 = vadd.f32 %v1533, %v1540
      %v1578 = vadd.f32 %v1534, %v1544
      %v1579 = vmax.f32 %v1547, 0.0
      %v1580 = vmax.f32 %v1548, 0.0
      %v1581 = vmax.f32 %v1549, 0.0
      %v1582 = vmax.f32 %v1550, 0.0
      %v1583 = vmax.f32 %v1551, 0.0
      %v1584 = vmax.f32 %v1552, 0.0
      %v1585 = vmax.f32 %v1553, 0.0
      %v1586 = vmax.f32 %v1554, 0.0
      %v1587 = vmax.f32 %v1555, 0.0
      %v1588 = vmax.f32 %v1556, 0.0
      %v1589 = vmax.f32 %v1557, 0.0
      %v1590 = vmax.f32 %v1558, 0.0
      %v1591 = vmax.f32 %v1559, 0.0
      %v1592 = vmax.f32 %v1560, 0.0
      %v1593 = vmax.f32 %v1561, 0.0
      %v1594 = vmax.f32 %v1562, 0.0
      %v1595 = vmax.f32 %v1563, 0.0
      %v1596 = vmax.f32 %v1564, 0.0
      %v1597 = vmax.f32 %v1565, 0.0
      %v1598 = vmax.f32 %v1566, 0.0
      %v1599 = vmax.f32 %v1567, 0.0
      %v1600 = vmax.f32 %v1568, 0.0
      %v1601 = vmax.f32 %v1569, 0.0
      %v1602 = vmax.f32 %v1570, 0.0
      %v1603 = vmax.f32 %v1571, 0.0
      %v1604 = vmax.f32 %v1572, 0.0
      %v1605 = vmax.f32 %v1573, 0.0
      %v1606 = vmax.f32 %v1574, 0.0
      %v1607 = vmax.f32 %v1575, 0.0
      %v1608 = vmax.f32 %v1576, 0.0
      %v1609 = vmax.f32 %v1577, 0.0
      %v1610 = vmax.f32 %v1578, 0.0
      %v1611 = vpack.c.bf16 %v1581, %v1579
      %v1612 = vpack.c.bf16 %v1582, %v1580
      %v1613 = vpack.c.bf16 %v1585, %v1583
      %v1614 = vpack.c.bf16 %v1586, %v1584
      %v1615 = vpack.c.bf16 %v1589, %v1587
      %v1616 = vpack.c.bf16 %v1590, %v1588
      %v1617 = vpack.c.bf16 %v1593, %v1591
      %v1618 = vpack.c.bf16 %v1594, %v1592
      %v1619 = vpack.c.bf16 %v1597, %v1595
      %v1620 = vpack.c.bf16 %v1598, %v1596
      %v1621 = vpack.c.bf16 %v1601, %v1599
      %v1622 = vpack.c.bf16 %v1602, %v1600
      %v1623 = vpack.c.bf16 %v1605, %v1603
      %v1624 = vpack.c.bf16 %v1606, %v1604
      %v1625 = vpack.c.bf16 %v1609, %v1607
      %v1626 = vpack.c.bf16 %v1610, %v1608
      %v1627 = vld [vmem:[%s5] sm:$0xf]
      %v1628 = vld [vmem:[%s5 + $0x4] sm:$0xf]
      %v1629 = vld [vmem:[%s5 + $0x8] sm:$0xf]
      %v1630 = vld [vmem:[%s5 + $0xc] sm:$0xf]
      %v1631 = vld [vmem:[%s5 + $0x10] sm:$0xf]
      %v1632 = vld [vmem:[%s5 + $0x14] sm:$0xf]
      %v1633 = vld [vmem:[%s5 + $0x18] sm:$0xf]
      %v1634 = vld [vmem:[%s5 + $0x1c] sm:$0xf]
      %v1635 = vld [vmem:[%s5 + $0x20] sm:$0xf]
      %v1636 = vld [vmem:[%s5 + $0x24] sm:$0xf]
      %v1637 = vld [vmem:[%s5 + $0x28] sm:$0xf]
      %v1638 = vld [vmem:[%s5 + $0x2c] sm:$0xf]
      %v1639 = vld [vmem:[%s5 + $0x30] sm:$0xf]
      %v1640 = vld [vmem:[%s5 + $0x34] sm:$0xf]
      %v1641 = vld [vmem:[%s5 + $0x38] sm:$0xf]
      %v1642 = vld [vmem:[%s5 + $0x3c] sm:$0xf]
      %v1643 = vld [vmem:[%s5 + $0x40] sm:$0xf]
      %v1644 = vld [vmem:[%s5 + $0x44] sm:$0xf]
      %v1645 = vld [vmem:[%s5 + $0x48] sm:$0xf]
      %v1646 = vld [vmem:[%s5 + $0x4c] sm:$0xf]
      %v1647 = vld [vmem:[%s5 + $0x50] sm:$0xf]
      %v1648 = vld [vmem:[%s5 + $0x54] sm:$0xf]
      %v1649 = vld [vmem:[%s5 + $0x58] sm:$0xf]
      %v1650 = vld [vmem:[%s5 + $0x5c] sm:$0xf]
      %v1651 = vld [vmem:[%s5 + $0x60] sm:$0xf]
      %v1652 = vld [vmem:[%s5 + $0x64] sm:$0xf]
      %v1653 = vld [vmem:[%s5 + $0x68] sm:$0xf]
      %v1654 = vld [vmem:[%s5 + $0x6c] sm:$0xf]
      %v1655 = vld [vmem:[%s5 + $0x70] sm:$0xf]
      %v1656 = vld [vmem:[%s5 + $0x74] sm:$0xf]
      %v1657 = vld [vmem:[%s5 + $0x78] sm:$0xf]
      %v1658 = vld [vmem:[%s5 + $0x7c] sm:$0xf]
      %v1691 = vunpack.c.l.b16 %v1627
      %v1692 = vunpack.c.l.b16 %v1628
      %v1693 = vunpack.c.l.b16 %v1629
      %v1694 = vunpack.c.l.b16 %v1630
      %v1695 = vunpack.c.l.b16 %v1631
      %v1696 = vunpack.c.l.b16 %v1632
      %v1697 = vunpack.c.l.b16 %v1633
      %v1698 = vunpack.c.l.b16 %v1634
      %v1699 = vunpack.c.l.b16 %v1635
      %v1700 = vunpack.c.l.b16 %v1636
      %v1701 = vunpack.c.l.b16 %v1637
      %v1702 = vunpack.c.l.b16 %v1638
      %v1703 = vunpack.c.l.b16 %v1639
      %v1704 = vunpack.c.l.b16 %v1640
      %v1705 = vunpack.c.l.b16 %v1641
      %v1706 = vunpack.c.l.b16 %v1642
      %v1707 = vunpack.c.l.b16 %v1643
      %v1708 = vunpack.c.l.b16 %v1644
      %v1709 = vunpack.c.l.b16 %v1645
      %v1710 = vunpack.c.l.b16 %v1646
      %v1711 = vunpack.c.l.b16 %v1647
      %v1712 = vunpack.c.l.b16 %v1648
      %v1713 = vunpack.c.l.b16 %v1649
      %v1714 = vunpack.c.l.b16 %v1650
      %v1715 = vunpack.c.l.b16 %v1651
      %v1716 = vunpack.c.l.b16 %v1652
      %v1717 = vunpack.c.l.b16 %v1653
      %v1718 = vunpack.c.l.b16 %v1654
      %v1719 = vunpack.c.l.b16 %v1655
      %v1720 = vunpack.c.l.b16 %v1656
      %v1721 = vunpack.c.l.b16 %v1657
      %v1722 = vunpack.c.l.b16 %v1658
      %v1723 = vpack.c.b16 %v1692, %v1691
      %v1724 = vpack.c.b16 %v1694, %v1693
      %v1725 = vpack.c.b16 %v1696, %v1695
      %v1726 = vpack.c.b16 %v1698, %v1697
      %v1727 = vpack.c.b16 %v1700, %v1699
      %v1728 = vpack.c.b16 %v1702, %v1701
      %v1729 = vpack.c.b16 %v1704, %v1703
      %v1730 = vpack.c.b16 %v1706, %v1705
      %v1731 = vpack.c.b16 %v1708, %v1707
      %v1732 = vpack.c.b16 %v1710, %v1709
      %v1733 = vpack.c.b16 %v1712, %v1711
      %v1734 = vpack.c.b16 %v1714, %v1713
      %v1735 = vpack.c.b16 %v1716, %v1715
      %v1736 = vpack.c.b16 %v1718, %v1717
      %v1737 = vpack.c.b16 %v1720, %v1719
      %v1738 = vpack.c.b16 %v1722, %v1721
      %1755 = vmatprep.subr.bf16.mxu0 0
      %1756 = vmatpush1.bf16.msra.mxu0 %v1723
      %1757 = vmatprep.subr.bf16.mxu0 0
      %1758 = vmatpush1.bf16.msra.mxu0 %v1724
      %1759 = vmatprep.subr.bf16.mxu0 0
      %1760 = vmatpush1.bf16.msra.mxu0 %v1725
      %1761 = vmatprep.subr.bf16.mxu0 0
      %1762 = vmatpush1.bf16.msra.mxu0 %v1726
      %1763 = vmatprep.subr.bf16.mxu0 0
      %1764 = vmatpush1.bf16.msra.mxu0 %v1727
      %1765 = vmatprep.subr.bf16.mxu0 0
      %1766 = vmatpush1.bf16.msra.mxu0 %v1728
      %1767 = vmatprep.subr.bf16.mxu0 0
      %1768 = vmatpush1.bf16.msra.mxu0 %v1729
      %1769 = vmatprep.subr.bf16.mxu0 0
      %1770 = vmatpush1.bf16.msra.mxu0 %v1730
      %1771 = vmatprep.subr.bf16.mxu0 0
      %1772 = vmatpush1.bf16.msra.mxu0 %v1731
      %1773 = vmatprep.subr.bf16.mxu0 0
      %1774 = vmatpush1.bf16.msra.mxu0 %v1732
      %1775 = vmatprep.subr.bf16.mxu0 0
      %1776 = vmatpush1.bf16.msra.mxu0 %v1733
      %1777 = vmatprep.subr.bf16.mxu0 0
      %1778 = vmatpush1.bf16.msra.mxu0 %v1734
      %1779 = vmatprep.subr.bf16.mxu0 0
      %1780 = vmatpush1.bf16.msra.mxu0 %v1735
      %1781 = vmatprep.subr.bf16.mxu0 0
      %1782 = vmatpush1.bf16.msra.mxu0 %v1736
      %1783 = vmatprep.subr.bf16.mxu0 0
      %1784 = vmatpush1.bf16.msra.mxu0 %v1737
      %1785 = vmatprep.subr.bf16.mxu0 0
      %1786 = vmatpush1.bf16.msra.mxu0 %v1738
      %1787 = vmatprep.mubr.bf16.mxu0 %v1612
      %1788 = vmatmul.mubr.bf16.gmra.mrb[0].mxu0 %v1611
      %v1789 = vpop.f32.mrb[0].mxu0
      %v1790 = vadd.f32 0.0, %v1789
      %v1791 = vpop.f32.mrb[0].mxu0
      %v1792 = vpop.f32.mrb[0].mxu0
      %v1793 = vadd.f32 0.0, %v1792
      %v1794 = vpop.f32.mrb[0].mxu0
      %1795 = vmatprep.mubr.bf16.mxu0 %v1614
      %1796 = vmatmul.mubr.bf16.gmra.mrb[0].mxu0 %v1613
      %v1797 = vpop.f32.mrb[0].mxu0
      %v1798 = vadd.f32 0.0, %v1797
      %v1799 = vpop.f32.mrb[0].mxu0
      %v1800 = vpop.f32.mrb[0].mxu0
      %v1801 = vadd.f32 0.0, %v1800
      %v1802 = vpop.f32.mrb[0].mxu0
      %1803 = vmatprep.mubr.bf16.mxu0 %v1616
      %1804 = vmatmul.mubr.bf16.gmra.mrb[0].mxu0 %v1615
      %v1805 = vpop.f32.mrb[0].mxu0
      %v1806 = vadd.f32 0.0, %v1805
      %v1807 = vpop.f32.mrb[0].mxu0
      %v1808 = vpop.f32.mrb[0].mxu0
      %v1809 = vadd.f32 0.0, %v1808
      %v1810 = vpop.f32.mrb[0].mxu0
      %1811 = vmatprep.mubr.bf16.mxu0 %v1618
      %1812 = vmatmul.mubr.bf16.gmra.mrb[0].mxu0 %v1617
      %v1813 = vpop.f32.mrb[0].mxu0
      %v1814 = vadd.f32 0.0, %v1813
      %v1815 = vpop.f32.mrb[0].mxu0
      %v1816 = vpop.f32.mrb[0].mxu0
      %v1817 = vadd.f32 0.0, %v1816
      %v1818 = vpop.f32.mrb[0].mxu0
      %1819 = vmatprep.mubr.bf16.mxu0 %v1620
      %1820 = vmatmul.mubr.bf16.gmra.mrb[0].mxu0 %v1619
      %v1821 = vpop.f32.mrb[0].mxu0
      %v1822 = vadd.f32 0.0, %v1821
      %v1823 = vpop.f32.mrb[0].mxu0
      %v1824 = vpop.f32.mrb[0].mxu0
      %v1825 = vadd.f32 0.0, %v1824
      %v1826 = vpop.f32.mrb[0].mxu0
      %1827 = vmatprep.mubr.bf16.mxu0 %v1622
      %1828 = vmatmul.mubr.bf16.gmra.mrb[0].mxu0 %v1621
      %v1829 = vpop.f32.mrb[0].mxu0
      %v1830 = vadd.f32 0.0, %v1829
      %v1831 = vpop.f32.mrb[0].mxu0
      %v1832 = vpop.f32.mrb[0].mxu0
      %v1833 = vadd.f32 0.0, %v1832
      %v1834 = vpop.f32.mrb[0].mxu0
      %1835 = vmatprep.mubr.bf16.mxu0 %v1624
      %1836 = vmatmul.mubr.bf16.gmra.mrb[0].mxu0 %v1623
      %v1837 = vpop.f32.mrb[0].mxu0
      %v1838 = vadd.f32 0.0, %v1837
      %v1839 = vpop.f32.mrb[0].mxu0
      %v1840 = vpop.f32.mrb[0].mxu0
      %v1841 = vadd.f32 0.0, %v1840
      %v1842 = vpop.f32.mrb[0].mxu0
      %1843 = vmatprep.mubr.bf16.mxu0 %v1626
      %1844 = vmatmul.mubr.bf16.gmra.mrb[0].mxu0 %v1625
      %v1845 = vpop.f32.mrb[0].mxu0
      %v1846 = vadd.f32 0.0, %v1845
      %v1847 = vpop.f32.mrb[0].mxu0
      %v1848 = vpop.f32.mrb[0].mxu0
      %v1849 = vadd.f32 0.0, %v1848
      %v1850 = vpop.f32.mrb[0].mxu0
      %1851 = vdwg.mxu0
      %v1852 = vmul.f32 %v952, %v1790
      %v1853 = vmul.f32 %v956, %v1793
      %v1854 = vmul.f32 %v960, %v1798
      %v1855 = vmul.f32 %v964, %v1801
      %v1856 = vmul.f32 %v968, %v1806
      %v1857 = vmul.f32 %v972, %v1809
      %v1858 = vmul.f32 %v976, %v1814
      %v1859 = vmul.f32 %v980, %v1817
      %v1860 = vmul.f32 %v984, %v1822
      %v1861 = vmul.f32 %v988, %v1825
      %v1862 = vmul.f32 %v992, %v1830
      %v1863 = vmul.f32 %v996, %v1833
      %v1864 = vmul.f32 %v1000, %v1838
      %v1865 = vmul.f32 %v1004, %v1841
      %v1866 = vmul.f32 %v1008, %v1846
      %v1867 = vmul.f32 %v1012, %v1849
      %v1868 = vpack.c.bf16 %v1853, %v1852
      %v1869 = vpack.c.bf16 %v1855, %v1854
      %v1870 = vpack.c.bf16 %v1857, %v1856
      %v1871 = vpack.c.bf16 %v1859, %v1858
      %v1872 = vpack.c.bf16 %v1861, %v1860
      %v1873 = vpack.c.bf16 %v1863, %v1862
      %v1874 = vpack.c.bf16 %v1865, %v1864
      %v1875 = vpack.c.bf16 %v1867, %v1866
      %1876 = vmatprep.subr.bf16.mxu0 0
      %1877 = vmatpush1.bf16.msra.mxu0 %v1868
      %1878 = vmatprep.subr.bf16.mxu0 0
      %1879 = vmatpush1.bf16.msra.mxu0 %v1869
      %1880 = vmatprep.subr.bf16.mxu0 0
      %1881 = vmatpush1.bf16.msra.mxu0 %v1870
      %1882 = vmatprep.subr.bf16.mxu0 0
      %1883 = vmatpush1.bf16.msra.mxu0 %v1871
      %1884 = vmatprep.subr.bf16.mxu0 0
      %1885 = vmatpush1.bf16.msra.mxu0 %v1872
      %1886 = vmatprep.subr.bf16.mxu0 0
      %1887 = vmatpush1.bf16.msra.mxu0 %v1873
      %1888 = vmatprep.subr.bf16.mxu0 0
      %1889 = vmatpush1.bf16.msra.mxu0 %v1874
      %1890 = vmatprep.subr.bf16.mxu0 0
      %1891 = vmatpush1.bf16.msra.mxu0 %v1875
      %1892 = vmatprep.subr.bf16.mxu0 0
      %1893 = vmatpush1.bf16.msra.mxu0 0
      %1894 = vmatprep.subr.bf16.mxu0 0
      %1895 = vmatpush1.bf16.msra.mxu0 0
      %1896 = vmatprep.subr.bf16.mxu0 0
      %1897 = vmatpush1.bf16.msra.mxu0 0
      %1898 = vmatprep.subr.bf16.mxu0 0
      %1899 = vmatpush1.bf16.msra.mxu0 0
      %1900 = vmatprep.subr.bf16.mxu0 0
      %1901 = vmatpush1.bf16.msra.mxu0 0
      %1902 = vmatprep.subr.bf16.mxu0 0
      %1903 = vmatpush1.bf16.msra.mxu0 0
      %1904 = vmatprep.subr.bf16.mxu0 0
      %1905 = vmatpush1.bf16.msra.mxu0 0
      %1906 = vmatprep.subr.bf16.mxu0 0
      %1907 = vmatpush1.bf16.msra.mxu0 0
      %1908 = vmatprep.mubr.bf16.mxu0 0
      %1909 = vmatmul.mubr.bf16.gmra.mrb[0].mxu0 %v1382
      %v1910 = vpop.f32.mrb[0].mxu0
      %v1911 = vadd.f32 0.0, %v1910
      %v1912 = vpop.f32.mrb[0].mxu0
      %v1913 = vpop.f32.mrb[0].mxu0
      %v1914 = vadd.f32 0.0, %v1913
      %v1915 = vpop.f32.mrb[0].mxu0
      %1916 = vmatprep.mubr.bf16.mxu0 0
      %1917 = vmatmul.mubr.bf16.gmra.mrb[0].mxu0 %v1383
      %v1918 = vpop.f32.mrb[0].mxu0
      %v1919 = vadd.f32 0.0, %v1918
      %v1920 = vpop.f32.mrb[0].mxu0
      %v1921 = vpop.f32.mrb[0].mxu0
      %v1922 = vadd.f32 0.0, %v1921
      %v1923 = vpop.f32.mrb[0].mxu0
      %1924 = vmatprep.mubr.bf16.mxu0 0
      %1925 = vmatmul.mubr.bf16.gmra.mrb[0].mxu0 %v1384
      %v1926 = vpop.f32.mrb[0].mxu0
      %v1927 = vadd.f32 0.0, %v1926
      %v1928 = vpop.f32.mrb[0].mxu0
      %v1929 = vpop.f32.mrb[0].mxu0
      %v1930 = vadd.f32 0.0, %v1929
      %v1931 = vpop.f32.mrb[0].mxu0
      %1932 = vmatprep.mubr.bf16.mxu0 0
      %1933 = vmatmul.mubr.bf16.gmra.mrb[0].mxu0 %v1385
      %v1934 = vpop.f32.mrb[0].mxu0
      %v1935 = vadd.f32 0.0, %v1934
      %v1936 = vpop.f32.mrb[0].mxu0
      %v1937 = vpop.f32.mrb[0].mxu0
      %v1938 = vadd.f32 0.0, %v1937
      %v1939 = vpop.f32.mrb[0].mxu0
      %1940 = vmatprep.mubr.bf16.mxu0 0
      %1941 = vmatmul.mubr.bf16.gmra.mrb[0].mxu0 %v1386
      %v1942 = vpop.f32.mrb[0].mxu0
      %v1943 = vadd.f32 0.0, %v1942
      %v1944 = vpop.f32.mrb[0].mxu0
      %v1945 = vpop.f32.mrb[0].mxu0
      %v1946 = vadd.f32 0.0, %v1945
      %v1947 = vpop.f32.mrb[0].mxu0
      %1948 = vmatprep.mubr.bf16.mxu0 0
      %1949 = vmatmul.mubr.bf16.gmra.mrb[0].mxu0 %v1387
      %v1950 = vpop.f32.mrb[0].mxu0
      %v1951 = vadd.f32 0.0, %v1950
      %v1952 = vpop.f32.mrb[0].mxu0
      %v1953 = vpop.f32.mrb[0].mxu0
      %v1954 = vadd.f32 0.0, %v1953
      %v1955 = vpop.f32.mrb[0].mxu0
      %1956 = vmatprep.mubr.bf16.mxu0 0
      %1957 = vmatmul.mubr.bf16.gmra.mrb[0].mxu0 %v1388
      %v1958 = vpop.f32.mrb[0].mxu0
      %v1959 = vadd.f32 0.0, %v1958
      %v1960 = vpop.f32.mrb[0].mxu0
      %v1961 = vpop.f32.mrb[0].mxu0
      %v1962 = vadd.f32 0.0, %v1961
      %v1963 = vpop.f32.mrb[0].mxu0
      %1964 = vmatprep.mubr.bf16.mxu0 0
      %1965 = vmatmul.mubr.bf16.gmra.mrb[0].mxu0 %v1389
      %v1966 = vpop.f32.mrb[0].mxu0
      %v1967 = vadd.f32 0.0, %v1966
      %v1968 = vpop.f32.mrb[0].mxu0
      %v1969 = vpop.f32.mrb[0].mxu0
      %v1970 = vadd.f32 0.0, %v1969
      %v1971 = vpop.f32.mrb[0].mxu0
      %1972 = vdwg.mxu0
      %v1973 = vmul.f32 %v952, %v1911
      %v1974 = vmul.f32 %v956, %v1914
      %v1975 = vmul.f32 %v960, %v1919
      %v1976 = vmul.f32 %v964, %v1922
      %v1977 = vmul.f32 %v968, %v1927
      %v1978 = vmul.f32 %v972, %v1930
      %v1979 = vmul.f32 %v976, %v1935
      %v1980 = vmul.f32 %v980, %v1938
      %v1981 = vmul.f32 %v984, %v1943
      %v1982 = vmul.f32 %v988, %v1946
      %v1983 = vmul.f32 %v992, %v1951
      %v1984 = vmul.f32 %v996, %v1954
      %v1985 = vmul.f32 %v1000, %v1959
      %v1986 = vmul.f32 %v1004, %v1962
      %v1987 = vmul.f32 %v1008, %v1967
      %v1988 = vmul.f32 %v1012, %v1970
      %v1989 = vld [vmem:[%s6] sm:$0x1]
      %v1991 = vlaneseq
      %v1992 = vshrl.u32 %v1991, 7
      %v1993 = vsub.s32 0, %v1992
      %v1994 = vrot.slane %v1989, %v1993
      %v1996 = vadd.f32 %v1973, %v1994
      %v1997 = vadd.f32 %v1974, %v1994
      %v1998 = vadd.f32 %v1975, %v1994
      %v1999 = vadd.f32 %v1976, %v1994
      %v2000 = vadd.f32 %v1977, %v1994
      %v2001 = vadd.f32 %v1978, %v1994
      %v2002 = vadd.f32 %v1979, %v1994
      %v2003 = vadd.f32 %v1980, %v1994
      %v2004 = vadd.f32 %v1981, %v1994
      %v2005 = vadd.f32 %v1982, %v1994
      %v2006 = vadd.f32 %v1983, %v1994
      %v2007 = vadd.f32 %v1984, %v1994
      %v2008 = vadd.f32 %v1985, %v1994
      %v2009 = vadd.f32 %v1986, %v1994
      %v2010 = vadd.f32 %v1987, %v1994
      %v2011 = vadd.f32 %v1988, %v1994
      %v2012 = vadd.f32 %v365, %v369
      %v2013 = vadd.f32 %v2012, %v373
      %v2014 = vadd.f32 %v2013, %v377
      %v2015 = vadd.f32 %v2014, %v381
      %v2016 = vadd.f32 %v2015, %v385
      %v2017 = vadd.f32 %v2016, %v389
      %v2018 = vadd.f32 %v2017, %v393
      %v2019 = vadd.f32 %v2018, %v397
      %v2020 = vadd.f32 %v2019, %v401
      %v2021 = vadd.f32 %v2020, %v405
      %v2022 = vadd.f32 %v2021, %v409
      %v2023 = vadd.f32 %v2022, %v413
      %v2024 = vadd.f32 %v2023, %v417
      %v2025 = vadd.f32 %v2024, %v421
      %v2026 = vadd.f32 %v2025, %v425
      %v2027 = vrot.slane %v2026, 4
      %v2028 = vadd.f32 %v2026, %v2027
      %v2029 = vrot.slane %v2028, 2
      %v2030 = vadd.f32 %v2028, %v2029
      %v2031 = vrot.slane %v2030, 1
      %v2032 = vadd.f32 %v2030, %v2031
      %v2033 = vmax.f32 %v2032, 1.0
      %v2034 = vrcp.pop %v2033
      %v2035 = vmul.f32 %v1996, %v365
      %v2036 = vmul.f32 %v1997, %v369
      %v2037 = vmul.f32 %v1998, %v373
      %v2038 = vmul.f32 %v1999, %v377
      %v2039 = vmul.f32 %v2000, %v381
      %v2040 = vmul.f32 %v2001, %v385
      %v2041 = vmul.f32 %v2002, %v389
      %v2042 = vmul.f32 %v2003, %v393
      %v2043 = vmul.f32 %v2004, %v397
      %v2044 = vmul.f32 %v2005, %v401
      %v2045 = vmul.f32 %v2006, %v405
      %v2046 = vmul.f32 %v2007, %v409
      %v2047 = vmul.f32 %v2008, %v413
      %v2048 = vmul.f32 %v2009, %v417
      %v2049 = vmul.f32 %v2010, %v421
      %v2050 = vmul.f32 %v2011, %v425
      %v2051 = vadd.f32 %v2035, %v2036
      %v2052 = vadd.f32 %v2051, %v2037
      %v2053 = vadd.f32 %v2052, %v2038
      %v2054 = vadd.f32 %v2053, %v2039
      %v2055 = vadd.f32 %v2054, %v2040
      %v2056 = vadd.f32 %v2055, %v2041
      %v2057 = vadd.f32 %v2056, %v2042
      %v2058 = vadd.f32 %v2057, %v2043
      %v2059 = vadd.f32 %v2058, %v2044
      %v2060 = vadd.f32 %v2059, %v2045
      %v2061 = vadd.f32 %v2060, %v2046
      %v2062 = vadd.f32 %v2061, %v2047
      %v2063 = vadd.f32 %v2062, %v2048
      %v2064 = vadd.f32 %v2063, %v2049
      %v2065 = vadd.f32 %v2064, %v2050
      %v2066 = vrot.slane %v2065, 4
      %v2067 = vadd.f32 %v2065, %v2066
      %v2068 = vrot.slane %v2067, 2
      %v2069 = vadd.f32 %v2067, %v2068
      %v2070 = vrot.slane %v2069, 1
      %v2071 = vadd.f32 %v2069, %v2070
      %v2072 = vmul.f32 %v2071, %v2034
      %2073 = vst [vmem:[%s308] sm:$0x1] %v2072
      %p2074 = scmp.lt.s32.totalorder %s18, 1
      %s2075 = scalar_select %p2074, %s18, 1
      %s2076 = scalar_lea.vmem %s7, %s2075
      // Predicated region
      $region49: #{roberta_gcn_forward.1} parent=47 // pred_check
        %p2077 = pneg %p198
      $region50: #{roberta_gcn_forward.1} parent=47 // pred_check_branch
        %2079 = sbr.rel (%p2077) target = $region52
      $region51: #{roberta_gcn_forward.1} parent=47 // pred_region
        _
      $region52: #{roberta_gcn_forward.1} parent=47 // pred_fallthru
        _
    $region48: #{roberta_gcn_forward.1} parent=5 // pred_fallthru
      _
    %p2080 = scmp.le.s32.totalorder 2, %s13
    // Predicated region
    $region53: #{roberta_gcn_forward.1} parent=5 // pred_check
      %p2081 = pneg %p2080
    $region54: #{roberta_gcn_forward.1} parent=5 // pred_check_branch
      %2083 = sbr.rel (%p2081) target = $region56
    $region55: #{roberta_gcn_forward.1} parent=5 // pred_region
      %s2084 = ssub.s32 %s13, 2
      // Predicated region
      $region57: #{roberta_gcn_forward.1} parent=55 // pred_check
        %p2085 = pneg %p204
      $region58: #{roberta_gcn_forward.1} parent=55 // pred_check_branch
        %2087 = sbr.rel (%p2085) target = $region60
      $region59: #{roberta_gcn_forward.1} parent=55 // pred_region
        %p2088 = scmp.lt.s32.totalorder %s19, 1
        %s2089 = scalar_select %p2088, %s19, 1
        %s2090 = scalar_lea.vmem %s7, %s2089
      $region60: #{roberta_gcn_forward.1} parent=55 // pred_fallthru
        _
    $region56: #{roberta_gcn_forward.1} parent=5 // pred_fallthru
      _
  $region6: #{roberta_gcn_forward.1} parent=0 // loop_footer
    %s17 = sadd.s32 1, %s13
  $region7: #{roberta_gcn_forward.1} parent=0 // loop_footer_branch
    %12 = sbr.rel target = $region3
  $region8: #{roberta_gcn_forward.1} parent=0 // loop_exit
    _

</llo_original>
